<compile_context>
chip_gen: v5e
topology: v5e:2x2
jax: 0.10.0
libtpu: 0.0.40
codegen_flags: <defaults>
</compile_context>

<pallas_src>
import math
import functools

import jax
import jax.numpy as jnp
from jax.experimental import pallas as pl
from jax.experimental.pallas import tpu as pltpu


def _vmem_limit_bytes():
    """Per-generation scoped VMEM budget (~3/4 of physical, capped at 96 MiB)."""
    try:
        cap = pltpu.get_tpu_info().vmem_capacity_bytes
        return int(min(96 * 1024 * 1024, (cap * 3) // 4))
    except Exception:
        return 48 * 1024 * 1024   # safe cross-generation fallback


# ----------------------------------------------------------------------------
# Fused encoder-stack kernel: grid = (batch, layer); layer axis is a serial
# ("arbitrary") accumulation over the residual stream kept in VMEM scratch.
# ----------------------------------------------------------------------------
def encoder_stack_kernel(
    x_ref,
    w_qkvs_ref, b_qkvs_ref,          # fused projection (1, D, 3D+H) bf16 / (1, 1, 3D+H) f32
    wo_ref, bo_ref,
    wc1_ref, bc1_ref, wc2_ref, bc2_ref,
    g1_ref, be1_ref, g2_ref, be2_ref,
    gf_ref, bf_ref,                  # final Encoder LayerNorm (constant across layers)
    d2_ref,                          # (L, L) precomputed |i-j|^2
    xo_ref, series_ref, prior_ref, sigma_ref,
    x_acc_ref,                       # (L, D) f32 VMEM residual-stream accumulator
    *, n_heads, head_dim, apply_final_norm,
):
    layer = pl.program_id(1)
    n_layers = pl.num_programs(1)

    # Load the residual stream from HBM only on the first layer of each batch
    # element; afterwards it stays resident in VMEM scratch.
    @pl.when(layer == 0)
    def _():
        x_acc_ref[...] = x_ref[0]

    x = x_acc_ref[...]                              # (L, D) float32
    L, D = x.shape
    H, E = n_heads, head_dim
    bf16 = jnp.bfloat16

    # ---- fused q/k/v/sigma projection: one wide bf16 MXU matmul ------------
    proj = jnp.dot(x.astype(bf16), w_qkvs_ref[0],
                   preferred_element_type=jnp.float32) + b_qkvs_ref[0]
    scale = 1.0 / math.sqrt(E)
    q = proj[:, 0 * D:1 * D] * scale                # fold 1/sqrt(E) into q (L*D muls)
    k = proj[:, 1 * D:2 * D]
    v = proj[:, 2 * D:3 * D]
    sig = proj[:, 3 * D:3 * D + H]                  # (L, H)

    # ---- batched multi-head attention (series branch) ----------------------
    # TODO(synk): fold the head transposes into dot_general batch dims
    # ('qhe,khe->hqk') once Mosaic handles non-leading batch dims robustly.
    qh = jnp.transpose(q.reshape(L, H, E), (1, 0, 2)).astype(bf16)   # (H, L, E)
    kh = jnp.transpose(k.reshape(L, H, E), (1, 0, 2)).astype(bf16)
    vh = jnp.transpose(v.reshape(L, H, E), (1, 0, 2)).astype(bf16)

    scores = jnp.einsum('hqe,hke->hqk', qh, kh,
                        preferred_element_type=jnp.float32)          # (H, L, L) f32
    m = jnp.max(scores, axis=-1, keepdims=True)
    p = jnp.exp(scores - m)
    denom = jnp.sum(p, axis=-1, keepdims=True)
    series = p * pl.reciprocal(denom, approx=True)   # EUP approx recip (softmax)
    series_ref[0] = series                           # single (H, L, L) store

    ctx = jnp.einsum('hqk,hke->hqe', series.astype(bf16), vh,
                     preferred_element_type=jnp.float32)             # (H, L, E)
    attn_out = jnp.transpose(ctx, (1, 0, 2)).reshape(L, D)           # lane-dense (L, D)

    # ---- sigma / Gaussian prior branch (vectorized over heads) -------------
    log3 = math.log(3.0)
    s = jax.nn.sigmoid(sig * 5.0) + 1e-5            # (L, H)
    s = jnp.exp(log3 * s) - 1.0                     # 3**s - 1
    st = jnp.transpose(s, (1, 0))                   # (H, L)
    sigma_ref[0] = st                               # compact store; broadcast outside

    log_coef = -jnp.log(math.sqrt(2.0 * math.pi) * st)   # (H, L)
    inv_2s2 = pl.reciprocal(2.0 * st * st)                # (H, L): exact 1/(2*sigma^2)
    prior_ref[0] = jnp.exp(
        log_coef[:, :, None] - d2_ref[...][None, :, :] * inv_2s2[:, :, None])

    # ---- output projection + residual + norm1 ------------------------------
    new_x = jnp.dot(attn_out.astype(bf16), wo_ref[0],
                    preferred_element_type=jnp.float32) + bo_ref[0]
    x1 = x + new_x                                  # dropout == identity

    mu = jnp.mean(x1, axis=-1, keepdims=True)
    var = jnp.mean((x1 - mu) ** 2, axis=-1, keepdims=True)
    x2 = (x1 - mu) * jax.lax.rsqrt(var + 1e-5) * g1_ref[0] + be1_ref[0]

    # ---- position-wise FFN (Conv1d k=1) + residual + norm2 ------------------
    ff = jnp.maximum(
        jnp.dot(x2.astype(bf16), wc1_ref[0],
                preferred_element_type=jnp.float32) + bc1_ref[0], 0.0)
    ff = jnp.dot(ff.astype(bf16), wc2_ref[0],
                 preferred_element_type=jnp.float32) + bc2_ref[0]
    x3 = x2 + ff

    mu2 = jnp.mean(x3, axis=-1, keepdims=True)
    var2 = jnp.mean((x3 - mu2) ** 2, axis=-1, keepdims=True)
    y = (x3 - mu2) * jax.lax.rsqrt(var2 + 1e-5) * g2_ref[0] + be2_ref[0]

    # keep the residual stream resident for the next layer
    x_acc_ref[...] = y

    # ---- last layer: fused final Encoder LayerNorm + single x writeback -----
    @pl.when(layer == n_layers - 1)
    def _():
        out = y
        if apply_final_norm:
            mu3 = jnp.mean(out, axis=-1, keepdims=True)
            var3 = jnp.mean((out - mu3) ** 2, axis=-1, keepdims=True)
            out = (out - mu3) * jax.lax.rsqrt(var3 + 1e-5) * gf_ref[...] + bf_ref[...]
        xo_ref[0] = out


# ----------------------------------------------------------------------------
# Wrapper: stacks per-layer weights, one pallas_call for the whole encoder.
# ----------------------------------------------------------------------------
def encoder_forward(x, layer_params, norm_params, d2, n_heads):
    B, L, D = x.shape
    H = n_heads
    E = D // H
    n_layers = len(layer_params)

    bf16 = jnp.bfloat16

    # Fused q/k/v/sigma projection per layer, stacked along a layer axis.
    w_qkvs = jnp.stack(
        [jnp.concatenate([p["wq"], p["wk"], p["wv"], p["ws"]], axis=1)
         for p in layer_params], axis=0).astype(bf16)              # (nl, D, 3D+H)
    b_qkvs = jnp.stack(
        [jnp.concatenate([p["bq"], p["bk"], p["bv"], p["bs"]], axis=1)
         for p in layer_params], axis=0)                           # (nl, 1, 3D+H)

    def stack(name, to_bf16=False):
        w = jnp.stack([p[name] for p in layer_params], axis=0)
        return w.astype(bf16) if to_bf16 else w

    wo = stack("wo", True);   bo = stack("bo")
    wc1 = stack("wc1", True); bc1 = stack("bc1")
    wc2 = stack("wc2", True); bc2 = stack("bc2")
    g1 = stack("g1");  be1 = stack("be1")
    g2 = stack("g2");  be2 = stack("be2")

    if norm_params is None:
        gf = jnp.ones((1, D), jnp.float32)
        bf = jnp.zeros((1, D), jnp.float32)
        apply_final_norm = False
    else:
        gf, bf = norm_params["gamma"], norm_params["beta"]
        apply_final_norm = True

    stacked = [w_qkvs, b_qkvs, wo, bo, wc1, bc1, wc2, bc2,
               g1, be1, g2, be2]

    in_specs = [pl.BlockSpec((1, L, D), lambda b, l: (b, 0, 0))]          # x
    for w in stacked:                                                     # per-layer weights
        in_specs.append(pl.BlockSpec((1,) + w.shape[1:], lambda b, l: (l, 0, 0)))
    in_specs.append(pl.BlockSpec((1, D), lambda b, l: (0, 0)))            # gf
    in_specs.append(pl.BlockSpec((1, D), lambda b, l: (0, 0)))            # bf
    in_specs.append(pl.BlockSpec((L, L), lambda b, l: (0, 0)))            # d2

    # TODO(synk): series/prior last dim is win_size (often 100 -> padded to 128
    # lanes => masked stores); if win_size is author-controlled pick a multiple
    # of 128 for lane-dense stores.
    out_shapes = (
        jax.ShapeDtypeStruct((B, L, D), jnp.float32),                # x_out
        jax.ShapeDtypeStruct((n_layers * B, H, L, L), jnp.float32),  # series (per layer)
        jax.ShapeDtypeStruct((n_layers * B, H, L, L), jnp.float32),  # prior  (per layer)
        jax.ShapeDtypeStruct((n_layers * B, H, L), jnp.float32),     # sigma  (compact)
    )
    out_specs = [
        pl.BlockSpec((1, L, D), lambda b, l: (b, 0, 0)),
        pl.BlockSpec((1, H, L, L), lambda b, l: (l * B + b, 0, 0, 0)),
        pl.BlockSpec((1, H, L, L), lambda b, l: (l * B + b, 0, 0, 0)),
        pl.BlockSpec((1, H, L), lambda b, l: (l * B + b, 0, 0)),
    ]

    kernel = functools.partial(encoder_stack_kernel, n_heads=H, head_dim=E,
                               apply_final_norm=apply_final_norm)

    x_out, series_all, prior_all, sigma_all = pl.pallas_call(
        kernel,
        out_shape=out_shapes,
        grid_spec=pltpu.PrefetchScalarGridSpec(
            num_scalar_prefetch=0,
            grid=(B, n_layers),
            in_specs=in_specs,
            out_specs=out_specs,
            scratch_shapes=[pltpu.VMEM((L, D), jnp.float32)],
        ),
        compiler_params=pltpu.CompilerParams(
            # batch elems independent (both TCs on v7x); layer axis is a serial
            # accumulation over the VMEM-resident residual stream.
            dimension_semantics=("parallel", "arbitrary"),
            vmem_limit_bytes=_vmem_limit_bytes()),
    )(x, *stacked, gf, bf, d2)

    series_all = series_all.reshape(n_layers, B, H, L, L)
    prior_all = prior_all.reshape(n_layers, B, H, L, L)
    sigma_all = sigma_all.reshape(n_layers, B, H, L)

    series_list = [series_all[i] for i in range(n_layers)]
    prior_list = [prior_all[i] for i in range(n_layers)]
    # reference returns sigma repeated along the key axis: (B, H, L, L)
    sigma_list = [jnp.broadcast_to(sigma_all[i][:, :, :, None], (B, H, L, L))
                  for i in range(n_layers)]
    return x_out, series_list, prior_list, sigma_list


# ----------------------------------------------------------------------------
# Deterministic parameter construction (synthetic init, not a checkpoint load)
# ----------------------------------------------------------------------------
def make_layer_params(key, d_model, n_heads, d_ff):
    ks = jax.random.split(key, 10)
    sc = 0.05
    p = {
        "wq":  sc * jax.random.normal(ks[0], (d_model, d_model), jnp.float32),
        "bq":  jnp.zeros((1, d_model), jnp.float32),
        "wk":  sc * jax.random.normal(ks[1], (d_model, d_model), jnp.float32),
        "bk":  jnp.zeros((1, d_model), jnp.float32),
        "wv":  sc * jax.random.normal(ks[2], (d_model, d_model), jnp.float32),
        "bv":  jnp.zeros((1, d_model), jnp.float32),
        "ws":  sc * jax.random.normal(ks[3], (d_model, n_heads), jnp.float32),
        "bs":  jnp.zeros((1, n_heads), jnp.float32),
        "wo":  sc * jax.random.normal(ks[4], (d_model, d_model), jnp.float32),
        "bo":  jnp.zeros((1, d_model), jnp.float32),
        # conv1d kernel_size=1 weights stored transposed: (in, out)
        "wc1": sc * jax.random.normal(ks[5], (d_model, d_ff), jnp.float32),
        "bc1": jnp.zeros((1, d_ff), jnp.float32),
        "wc2": sc * jax.random.normal(ks[6], (d_ff, d_model), jnp.float32),
        "bc2": jnp.zeros((1, d_model), jnp.float32),
        "g1":  jnp.ones((1, d_model), jnp.float32),
        "be1": jnp.zeros((1, d_model), jnp.float32),
        "g2":  jnp.ones((1, d_model), jnp.float32),
        "be2": jnp.zeros((1, d_model), jnp.float32),
    }
    return p


if __name__ == "__main__":
    B, L, D, H, d_ff, num_layers = 2, 8, 32, 4, 64, 2

    key = jax.random.PRNGKey(0)
    kx, *layer_keys = jax.random.split(key, num_layers + 1)

    x = jax.random.normal(kx, (B, L, D), jnp.float32)

    # |i - j|^2 distance matrix (win_size x win_size), precomputed on the host
    idx = jnp.arange(L, dtype=jnp.float32)
    d2 = (idx[:, None] - idx[None, :]) ** 2

    layer_params = [make_layer_params(layer_keys[i], D, H, d_ff)
                    for i in range(num_layers)]
    norm_params = {"gamma": jnp.ones((1, D), jnp.float32),
                   "beta":  jnp.zeros((1, D), jnp.float32)}

    # TODO(synk): dropout layers are identity (eval mode / p=0); the reference
    # module's per-layer host-side shape print is omitted.
    x_out, series_list, prior_list, sigma_list = encoder_forward(
        x, layer_params, norm_params, d2, H)

    jax.block_until_ready(x_out)
    for t in series_list + prior_list + sigma_list:
        jax.block_until_ready(t)

    assert x_out.shape == (B, L, D)
    assert all(s.shape == (B, H, L, L) for s in series_list)
    assert all(p.shape == (B, H, L, L) for p in prior_list)
    assert all(s.shape == (B, H, L, L) for s in sigma_list)
    assert all(bool(jnp.isfinite(t).all()) for t in [x_out] + series_list
               + prior_list + sigma_list)

    print("KERNEL_OK")
</pallas_src>

<mosaic_0001>
module attributes {stable_mosaic.version = 11 : i64} {
  func.func @encoder_stack_kernel(%arg0: i32, %arg1: i32, %arg2: memref<1x8x32xf32, #tpu.memory_space<vmem>>, %arg3: memref<1x32x100xbf16, #tpu.memory_space<vmem>>, %arg4: memref<1x1x100xf32, #tpu.memory_space<vmem>>, %arg5: memref<1x32x32xbf16, #tpu.memory_space<vmem>>, %arg6: memref<1x1x32xf32, #tpu.memory_space<vmem>>, %arg7: memref<1x32x64xbf16, #tpu.memory_space<vmem>>, %arg8: memref<1x1x64xf32, #tpu.memory_space<vmem>>, %arg9: memref<1x64x32xbf16, #tpu.memory_space<vmem>>, %arg10: memref<1x1x32xf32, #tpu.memory_space<vmem>>, %arg11: memref<1x1x32xf32, #tpu.memory_space<vmem>>, %arg12: memref<1x1x32xf32, #tpu.memory_space<vmem>>, %arg13: memref<1x1x32xf32, #tpu.memory_space<vmem>>, %arg14: memref<1x1x32xf32, #tpu.memory_space<vmem>>, %arg15: memref<1x32xf32, #tpu.memory_space<vmem>>, %arg16: memref<1x32xf32, #tpu.memory_space<vmem>>, %arg17: memref<8x8xf32, #tpu.memory_space<vmem>>, %arg18: memref<1x8x32xf32, #tpu.memory_space<vmem>>, %arg19: memref<1x4x8x8xf32, #tpu.memory_space<vmem>>, %arg20: memref<1x4x8x8xf32, #tpu.memory_space<vmem>>, %arg21: memref<1x4x8xf32, #tpu.memory_space<vmem>>, %arg22: memref<8x32xf32, #tpu.memory_space<vmem>>) attributes {dimension_semantics = [#tpu.dimension_semantics<parallel>, #tpu.dimension_semantics<arbitrary>], iteration_bounds = array<i64: 2, 2>, scalar_prefetch = 0 : i64, scratch_operands = 1 : i64, tpu.core_type = #tpu.core_type<tc>, window_params = [{transform_indices = @transform_0, window_bounds = array<i64: 1, 8, 32>}, {transform_indices = @transform_1, window_bounds = array<i64: 1, 32, 100>}, {transform_indices = @transform_2, window_bounds = array<i64: 1, 1, 100>}, {transform_indices = @transform_3, window_bounds = array<i64: 1, 32, 32>}, {transform_indices = @transform_4, window_bounds = array<i64: 1, 1, 32>}, {transform_indices = @transform_5, window_bounds = array<i64: 1, 32, 64>}, {transform_indices = @transform_6, window_bounds = array<i64: 1, 1, 64>}, {transform_indices = @transform_7, window_bounds = array<i64: 1, 64, 32>}, {transform_indices = @transform_8, window_bounds = array<i64: 1, 1, 32>}, {transform_indices = @transform_9, window_bounds = array<i64: 1, 1, 32>}, {transform_indices = @transform_10, window_bounds = array<i64: 1, 1, 32>}, {transform_indices = @transform_11, window_bounds = array<i64: 1, 1, 32>}, {transform_indices = @transform_12, window_bounds = array<i64: 1, 1, 32>}, {pipeline_mode = #tpu.pipeline_mode<synchronous>, transform_indices = @transform_13, window_bounds = array<i64: 1, 32>}, {pipeline_mode = #tpu.pipeline_mode<synchronous>, transform_indices = @transform_14, window_bounds = array<i64: 1, 32>}, {pipeline_mode = #tpu.pipeline_mode<synchronous>, transform_indices = @transform_15, window_bounds = array<i64: 8, 8>}, {transform_indices = @transform_16, window_bounds = array<i64: 1, 8, 32>}, {transform_indices = @transform_17, window_bounds = array<i64: 1, 4, 8, 8>}, {transform_indices = @transform_18, window_bounds = array<i64: 1, 4, 8, 8>}, {transform_indices = @transform_19, window_bounds = array<i64: 1, 4, 8>}]} {
    %c0_i32 = arith.constant 0 : i32
    %0 = arith.cmpi eq, %arg1, %c0_i32 : i32
    %1 = arith.extui %0 : i1 to i32
    %c0_i32_0 = arith.constant 0 : i32
    %2 = arith.cmpi ne, %1, %c0_i32_0 : i32
    scf.if %2 {
      %c0_81 = arith.constant 0 : index
      %c0_82 = arith.constant 0 : index
      %c0_83 = arith.constant 0 : index
      %169 = vector.load %arg2[%c0_81, %c0_82, %c0_83] : memref<1x8x32xf32, #tpu.memory_space<vmem>>, vector<1x8x32xf32>
      %170 = vector.shape_cast %169 : vector<1x8x32xf32> to vector<8x32xf32>
      %c0_84 = arith.constant 0 : index
      %c0_85 = arith.constant 0 : index
      %171 = vector.load %arg22[%c0_84, %c0_85] : memref<8x32xf32, #tpu.memory_space<vmem>>, vector<8x32xf32>
      tpu.vector_store %arg22[%c0_84, %c0_85], %170 {strides = array<i32>} : memref<8x32xf32, #tpu.memory_space<vmem>>, vector<8x32xf32>,
    } else {
    }
    %c0 = arith.constant 0 : index
    %c0_1 = arith.constant 0 : index
    %3 = vector.load %arg22[%c0, %c0_1] : memref<8x32xf32, #tpu.memory_space<vmem>>, vector<8x32xf32>
    %4 = arith.truncf %3 : vector<8x32xf32> to vector<8x32xbf16>
    %c0_2 = arith.constant 0 : index
    %c0_3 = arith.constant 0 : index
    %c0_4 = arith.constant 0 : index
    %5 = vector.load %arg3[%c0_2, %c0_3, %c0_4] : memref<1x32x100xbf16, #tpu.memory_space<vmem>>, vector<1x32x100xbf16>
    %6 = vector.shape_cast %5 : vector<1x32x100xbf16> to vector<32x100xbf16>
    %cst = arith.constant dense<0.000000e+00> : vector<8x100xf32>
    %7 = tpu.matmul %4, %6, %cst {dimension_numbers = #tpu.dot_dimension_numbers<[1], [0], [0], [1], [0, 0, 1, 1], [], []>} : vector<8x32xbf16>, vector<32x100xbf16>, vector<8x100xf32> -> vector<8x100xf32>
    %c0_5 = arith.constant 0 : index
    %c0_6 = arith.constant 0 : index
    %c0_7 = arith.constant 0 : index
    %8 = vector.load %arg4[%c0_5, %c0_6, %c0_7] : memref<1x1x100xf32, #tpu.memory_space<vmem>>, vector<1x1x100xf32>
    %9 = vector.shape_cast %8 : vector<1x1x100xf32> to vector<1x100xf32>
    %10 = vector.broadcast %9 : vector<1x100xf32> to vector<8x100xf32>
    %11 = arith.addf %7, %10 : vector<8x100xf32>
    %12 = vector.extract_strided_slice %11 {offsets = [0, 0], sizes = [8, 32], strides = [1, 1]} : vector<8x100xf32> to vector<8x32xf32>
    %cst_8 = arith.constant 0.353553385 : f32
    %13 = vector.broadcast %cst_8 : f32 to vector<8x32xf32>
    %14 = arith.mulf %12, %13 : vector<8x32xf32>
    %15 = vector.extract_strided_slice %11 {offsets = [0, 32], sizes = [8, 32], strides = [1, 1]} : vector<8x100xf32> to vector<8x32xf32>
    %16 = vector.extract_strided_slice %11 {offsets = [0, 64], sizes = [8, 32], strides = [1, 1]} : vector<8x100xf32> to vector<8x32xf32>
    %17 = vector.extract_strided_slice %11 {offsets = [0, 96], sizes = [8, 4], strides = [1, 1]} : vector<8x100xf32> to vector<8x4xf32>
    %18 = vector.shape_cast %14 : vector<8x32xf32> to vector<8x4x8xf32>
    %19 = tpu.transpose %18, [1, 0, 2] : vector<8x4x8xf32> -> vector<4x8x8xf32>
    %20 = arith.truncf %19 : vector<4x8x8xf32> to vector<4x8x8xbf16>
    %21 = vector.shape_cast %15 : vector<8x32xf32> to vector<8x4x8xf32>
    %22 = tpu.transpose %21, [1, 0, 2] : vector<8x4x8xf32> -> vector<4x8x8xf32>
    %23 = arith.truncf %22 : vector<4x8x8xf32> to vector<4x8x8xbf16>
    %24 = vector.shape_cast %16 : vector<8x32xf32> to vector<8x4x8xf32>
    %25 = tpu.transpose %24, [1, 0, 2] : vector<8x4x8xf32> -> vector<4x8x8xf32>
    %26 = arith.truncf %25 : vector<4x8x8xf32> to vector<4x8x8xbf16>
    "tpu.trace_start"() <{level = 10 : i32, message = "hqe,hke->hqk"}> : () -> ()
    %cst_9 = arith.constant dense<0.000000e+00> : vector<4x8x8xf32>
    %27 = tpu.matmul %20, %23, %cst_9 {dimension_numbers = #tpu.dot_dimension_numbers<[2], [2], [1], [1], [0, 0, 0, 1, 1, 1], [0], [0]>} : vector<4x8x8xbf16>, vector<4x8x8xbf16>, vector<4x8x8xf32> -> vector<4x8x8xf32>
    "tpu.trace_stop"() : () -> ()
    %cst_10 = arith.constant dense<0xFF800000> : vector<4x8xf32>
    %28 = vector.multi_reduction <maximumf>, %27, %cst_10 [2] : vector<4x8x8xf32> to vector<4x8xf32>
    %29 = vector.shape_cast %28 : vector<4x8xf32> to vector<4x8x1xf32>
    %30 = vector.broadcast %29 : vector<4x8x1xf32> to vector<4x8x8xf32>
    %31 = arith.subf %27, %30 : vector<4x8x8xf32>
    %32 = math.exp %31 : vector<4x8x8xf32>
    %cst_11 = arith.constant dense<0.000000e+00> : vector<4x8xf32>
    %33 = vector.multi_reduction <add>, %32, %cst_11 [2] : vector<4x8x8xf32> to vector<4x8xf32>
    %34 = vector.shape_cast %33 : vector<4x8xf32> to vector<4x8x1xf32>
    %35 = tpu.reciprocal %34 {approx = true} : vector<4x8x1xf32> -> vector<4x8x1xf32>
    %36 = vector.broadcast %35 : vector<4x8x1xf32> to vector<4x8x8xf32>
    %37 = arith.mulf %32, %36 : vector<4x8x8xf32>
    %c0_12 = arith.constant 0 : index
    %c0_13 = arith.constant 0 : index
    %c0_14 = arith.constant 0 : index
    %c0_15 = arith.constant 0 : index
    %38 = vector.load %arg19[%c0_12, %c0_13, %c0_14, %c0_15] : memref<1x4x8x8xf32, #tpu.memory_space<vmem>>, vector<1x4x8x8xf32>
    %39 = vector.shape_cast %38 : vector<1x4x8x8xf32> to vector<4x8x8xf32>
    %40 = vector.shape_cast %37 : vector<4x8x8xf32> to vector<1x4x8x8xf32>
    tpu.vector_store %arg19[%c0_12, %c0_13, %c0_14, %c0_15], %40 {strides = array<i32>} : memref<1x4x8x8xf32, #tpu.memory_space<vmem>>, vector<1x4x8x8xf32>,
    %41 = arith.truncf %37 : vector<4x8x8xf32> to vector<4x8x8xbf16>
    "tpu.trace_start"() <{level = 10 : i32, message = "hqk,hke->hqe"}> : () -> ()
    %cst_16 = arith.constant dense<0.000000e+00> : vector<4x8x8xf32>
    %42 = tpu.matmul %41, %26, %cst_16 {dimension_numbers = #tpu.dot_dimension_numbers<[2], [1], [1], [2], [0, 0, 0, 1, 1, 2], [0], [0]>} : vector<4x8x8xbf16>, vector<4x8x8xbf16>, vector<4x8x8xf32> -> vector<4x8x8xf32>
    "tpu.trace_stop"() : () -> ()
    %43 = tpu.transpose %42, [1, 0, 2] : vector<4x8x8xf32> -> vector<8x4x8xf32>
    %44 = vector.shape_cast %43 : vector<8x4x8xf32> to vector<8x32xf32>
    %cst_17 = arith.constant 5.000000e+00 : f32
    %45 = vector.broadcast %cst_17 : f32 to vector<8x4xf32>
    %46 = arith.mulf %17, %45 : vector<8x4xf32>
    %47 = arith.negf %46 : vector<8x4xf32>
    %48 = math.exp %47 : vector<8x4xf32>
    %cst_18 = arith.constant 1.000000e+00 : f32
    %49 = vector.broadcast %cst_18 : f32 to vector<8x4xf32>
    %50 = arith.addf %49, %48 : vector<8x4xf32>
    %51 = arith.divf %49, %50 : vector<8x4xf32>
    %cst_19 = arith.constant 9.99999974E-6 : f32
    %52 = vector.broadcast %cst_19 : f32 to vector<8x4xf32>
    %53 = arith.addf %51, %52 : vector<8x4xf32>
    %cst_20 = arith.constant 1.09861231 : f32
    %54 = vector.broadcast %cst_20 : f32 to vector<8x4xf32>
    %55 = arith.mulf %54, %53 : vector<8x4xf32>
    %56 = math.exp %55 : vector<8x4xf32>
    %cst_21 = arith.constant 1.000000e+00 : f32
    %57 = vector.broadcast %cst_21 : f32 to vector<8x4xf32>
    %58 = arith.subf %56, %57 : vector<8x4xf32>
    %59 = tpu.transpose %58, [1, 0] : vector<8x4xf32> -> vector<4x8xf32>
    %c0_22 = arith.constant 0 : index
    %c0_23 = arith.constant 0 : index
    %c0_24 = arith.constant 0 : index
    %60 = vector.load %arg21[%c0_22, %c0_23, %c0_24] : memref<1x4x8xf32, #tpu.memory_space<vmem>>, vector<1x4x8xf32>
    %61 = vector.shape_cast %60 : vector<1x4x8xf32> to vector<4x8xf32>
    %62 = vector.shape_cast %59 : vector<4x8xf32> to vector<1x4x8xf32>
    tpu.vector_store %arg21[%c0_22, %c0_23, %c0_24], %62 {strides = array<i32>} : memref<1x4x8xf32, #tpu.memory_space<vmem>>, vector<1x4x8xf32>,
    %cst_25 = arith.constant 2.50662827 : f32
    %63 = vector.broadcast %cst_25 : f32 to vector<4x8xf32>
    %64 = arith.mulf %63, %59 : vector<4x8xf32>
    %65 = math.log %64 : vector<4x8xf32>
    %cst_26 = arith.constant 0.000000e+00 : f32
    %66 = vector.broadcast %cst_26 : f32 to vector<4x8xf32>
    %67 = arith.subf %66, %65 : vector<4x8xf32>
    %cst_27 = arith.constant 2.000000e+00 : f32
    %68 = vector.broadcast %cst_27 : f32 to vector<4x8xf32>
    %69 = arith.mulf %68, %59 : vector<4x8xf32>
    %70 = arith.mulf %69, %59 : vector<4x8xf32>
    %71 = tpu.reciprocal %70 : vector<4x8xf32> -> vector<4x8xf32>
    %72 = vector.shape_cast %67 : vector<4x8xf32> to vector<4x8x1xf32>
    %c0_28 = arith.constant 0 : index
    %c0_29 = arith.constant 0 : index
    %73 = vector.load %arg17[%c0_28, %c0_29] : memref<8x8xf32, #tpu.memory_space<vmem>>, vector<8x8xf32>
    %74 = vector.shape_cast %73 : vector<8x8xf32> to vector<1x8x8xf32>
    %75 = vector.shape_cast %71 : vector<4x8xf32> to vector<4x8x1xf32>
    %76 = vector.broadcast %74 : vector<1x8x8xf32> to vector<4x8x8xf32>
    %77 = vector.broadcast %75 : vector<4x8x1xf32> to vector<4x8x8xf32>
    %78 = arith.mulf %76, %77 : vector<4x8x8xf32>
    %79 = vector.broadcast %72 : vector<4x8x1xf32> to vector<4x8x8xf32>
    %80 = arith.subf %79, %78 : vector<4x8x8xf32>
    %81 = math.exp %80 : vector<4x8x8xf32>
    %c0_30 = arith.constant 0 : index
    %c0_31 = arith.constant 0 : index
    %c0_32 = arith.constant 0 : index
    %c0_33 = arith.constant 0 : index
    %82 = vector.load %arg20[%c0_30, %c0_31, %c0_32, %c0_33] : memref<1x4x8x8xf32, #tpu.memory_space<vmem>>, vector<1x4x8x8xf32>
    %83 = vector.shape_cast %82 : vector<1x4x8x8xf32> to vector<4x8x8xf32>
    %84 = vector.shape_cast %81 : vector<4x8x8xf32> to vector<1x4x8x8xf32>
    tpu.vector_store %arg20[%c0_30, %c0_31, %c0_32, %c0_33], %84 {strides = array<i32>} : memref<1x4x8x8xf32, #tpu.memory_space<vmem>>, vector<1x4x8x8xf32>,
    %85 = arith.truncf %44 : vector<8x32xf32> to vector<8x32xbf16>
    %c0_34 = arith.constant 0 : index
    %c0_35 = arith.constant 0 : index
    %c0_36 = arith.constant 0 : index
    %86 = vector.load %arg5[%c0_34, %c0_35, %c0_36] : memref<1x32x32xbf16, #tpu.memory_space<vmem>>, vector<1x32x32xbf16>
    %87 = vector.shape_cast %86 : vector<1x32x32xbf16> to vector<32x32xbf16>
    %cst_37 = arith.constant dense<0.000000e+00> : vector<8x32xf32>
    %88 = tpu.matmul %85, %87, %cst_37 {dimension_numbers = #tpu.dot_dimension_numbers<[1], [0], [0], [1], [0, 0, 1, 1], [], []>} : vector<8x32xbf16>, vector<32x32xbf16>, vector<8x32xf32> -> vector<8x32xf32>
    %c0_38 = arith.constant 0 : index
    %c0_39 = arith.constant 0 : index
    %c0_40 = arith.constant 0 : index
    %89 = vector.load %arg6[%c0_38, %c0_39, %c0_40] : memref<1x1x32xf32, #tpu.memory_space<vmem>>, vector<1x1x32xf32>
    %90 = vector.shape_cast %89 : vector<1x1x32xf32> to vector<1x32xf32>
    %91 = vector.broadcast %90 : vector<1x32xf32> to vector<8x32xf32>
    %92 = arith.addf %88, %91 : vector<8x32xf32>
    %93 = arith.addf %3, %92 : vector<8x32xf32>
    %cst_41 = arith.constant dense<0.000000e+00> : vector<8xf32>
    %94 = vector.multi_reduction <add>, %93, %cst_41 [1] : vector<8x32xf32> to vector<8xf32>
    %95 = vector.shape_cast %94 : vector<8xf32> to vector<8x1xf32>
    %cst_42 = arith.constant 3.200000e+01 : f32
    %96 = vector.broadcast %cst_42 : f32 to vector<8x1xf32>
    %97 = arith.divf %95, %96 : vector<8x1xf32>
    %98 = vector.broadcast %97 : vector<8x1xf32> to vector<8x32xf32>
    %99 = arith.subf %93, %98 : vector<8x32xf32>
    %100 = arith.mulf %99, %99 : vector<8x32xf32>
    %cst_43 = arith.constant dense<0.000000e+00> : vector<8xf32>
    %101 = vector.multi_reduction <add>, %100, %cst_43 [1] : vector<8x32xf32> to vector<8xf32>
    %102 = vector.shape_cast %101 : vector<8xf32> to vector<8x1xf32>
    %cst_44 = arith.constant 3.200000e+01 : f32
    %103 = vector.broadcast %cst_44 : f32 to vector<8x1xf32>
    %104 = arith.divf %102, %103 : vector<8x1xf32>
    %105 = vector.broadcast %97 : vector<8x1xf32> to vector<8x32xf32>
    %106 = arith.subf %93, %105 : vector<8x32xf32>
    %cst_45 = arith.constant 9.99999974E-6 : f32
    %107 = vector.broadcast %cst_45 : f32 to vector<8x1xf32>
    %108 = arith.addf %104, %107 : vector<8x1xf32>
    %109 = math.rsqrt %108 : vector<8x1xf32>
    %110 = vector.broadcast %109 : vector<8x1xf32> to vector<8x32xf32>
    %111 = arith.mulf %106, %110 : vector<8x32xf32>
    %c0_46 = arith.constant 0 : index
    %c0_47 = arith.constant 0 : index
    %c0_48 = arith.constant 0 : index
    %112 = vector.load %arg11[%c0_46, %c0_47, %c0_48] : memref<1x1x32xf32, #tpu.memory_space<vmem>>, vector<1x1x32xf32>
    %113 = vector.shape_cast %112 : vector<1x1x32xf32> to vector<1x32xf32>
    %114 = vector.broadcast %113 : vector<1x32xf32> to vector<8x32xf32>
    %115 = arith.mulf %111, %114 : vector<8x32xf32>
    %c0_49 = arith.constant 0 : index
    %c0_50 = arith.constant 0 : index
    %c0_51 = arith.constant 0 : index
    %116 = vector.load %arg12[%c0_49, %c0_50, %c0_51] : memref<1x1x32xf32, #tpu.memory_space<vmem>>, vector<1x1x32xf32>
    %117 = vector.shape_cast %116 : vector<1x1x32xf32> to vector<1x32xf32>
    %118 = vector.broadcast %117 : vector<1x32xf32> to vector<8x32xf32>
    %119 = arith.addf %115, %118 : vector<8x32xf32>
    %120 = arith.truncf %119 : vector<8x32xf32> to vector<8x32xbf16>
    %c0_52 = arith.constant 0 : index
    %c0_53 = arith.constant 0 : index
    %c0_54 = arith.constant 0 : index
    %121 = vector.load %arg7[%c0_52, %c0_53, %c0_54] : memref<1x32x64xbf16, #tpu.memory_space<vmem>>, vector<1x32x64xbf16>
    %122 = vector.shape_cast %121 : vector<1x32x64xbf16> to vector<32x64xbf16>
    %cst_55 = arith.constant dense<0.000000e+00> : vector<8x64xf32>
    %123 = tpu.matmul %120, %122, %cst_55 {dimension_numbers = #tpu.dot_dimension_numbers<[1], [0], [0], [1], [0, 0, 1, 1], [], []>} : vector<8x32xbf16>, vector<32x64xbf16>, vector<8x64xf32> -> vector<8x64xf32>
    %c0_56 = arith.constant 0 : index
    %c0_57 = arith.constant 0 : index
    %c0_58 = arith.constant 0 : index
    %124 = vector.load %arg8[%c0_56, %c0_57, %c0_58] : memref<1x1x64xf32, #tpu.memory_space<vmem>>, vector<1x1x64xf32>
    %125 = vector.shape_cast %124 : vector<1x1x64xf32> to vector<1x64xf32>
    %126 = vector.broadcast %125 : vector<1x64xf32> to vector<8x64xf32>
    %127 = arith.addf %123, %126 : vector<8x64xf32>
    %cst_59 = arith.constant 0.000000e+00 : f32
    %128 = vector.broadcast %cst_59 : f32 to vector<8x64xf32>
    %129 = arith.maximumf %127, %128 : vector<8x64xf32>
    %130 = arith.truncf %129 : vector<8x64xf32> to vector<8x64xbf16>
    %c0_60 = arith.constant 0 : index
    %c0_61 = arith.constant 0 : index
    %c0_62 = arith.constant 0 : index
    %131 = vector.load %arg9[%c0_60, %c0_61, %c0_62] : memref<1x64x32xbf16, #tpu.memory_space<vmem>>, vector<1x64x32xbf16>
    %132 = vector.shape_cast %131 : vector<1x64x32xbf16> to vector<64x32xbf16>
    %cst_63 = arith.constant dense<0.000000e+00> : vector<8x32xf32>
    %133 = tpu.matmul %130, %132, %cst_63 {dimension_numbers = #tpu.dot_dimension_numbers<[1], [0], [0], [1], [0, 0, 1, 1], [], []>} : vector<8x64xbf16>, vector<64x32xbf16>, vector<8x32xf32> -> vector<8x32xf32>
    %c0_64 = arith.constant 0 : index
    %c0_65 = arith.constant 0 : index
    %c0_66 = arith.constant 0 : index
    %134 = vector.load %arg10[%c0_64, %c0_65, %c0_66] : memref<1x1x32xf32, #tpu.memory_space<vmem>>, vector<1x1x32xf32>
    %135 = vector.shape_cast %134 : vector<1x1x32xf32> to vector<1x32xf32>
    %136 = vector.broadcast %135 : vector<1x32xf32> to vector<8x32xf32>
    %137 = arith.addf %133, %136 : vector<8x32xf32>
    %138 = arith.addf %119, %137 : vector<8x32xf32>
    %cst_67 = arith.constant dense<0.000000e+00> : vector<8xf32>
    %139 = vector.multi_reduction <add>, %138, %cst_67 [1] : vector<8x32xf32> to vector<8xf32>
    %140 = vector.shape_cast %139 : vector<8xf32> to vector<8x1xf32>
    %cst_68 = arith.constant 3.200000e+01 : f32
    %141 = vector.broadcast %cst_68 : f32 to vector<8x1xf32>
    %142 = arith.divf %140, %141 : vector<8x1xf32>
    %143 = vector.broadcast %142 : vector<8x1xf32> to vector<8x32xf32>
    %144 = arith.subf %138, %143 : vector<8x32xf32>
    %145 = arith.mulf %144, %144 : vector<8x32xf32>
    %cst_69 = arith.constant dense<0.000000e+00> : vector<8xf32>
    %146 = vector.multi_reduction <add>, %145, %cst_69 [1] : vector<8x32xf32> to vector<8xf32>
    %147 = vector.shape_cast %146 : vector<8xf32> to vector<8x1xf32>
    %cst_70 = arith.constant 3.200000e+01 : f32
    %148 = vector.broadcast %cst_70 : f32 to vector<8x1xf32>
    %149 = arith.divf %147, %148 : vector<8x1xf32>
    %150 = vector.broadcast %142 : vector<8x1xf32> to vector<8x32xf32>
    %151 = arith.subf %138, %150 : vector<8x32xf32>
    %cst_71 = arith.constant 9.99999974E-6 : f32
    %152 = vector.broadcast %cst_71 : f32 to vector<8x1xf32>
    %153 = arith.addf %149, %152 : vector<8x1xf32>
    %154 = math.rsqrt %153 : vector<8x1xf32>
    %155 = vector.broadcast %154 : vector<8x1xf32> to vector<8x32xf32>
    %156 = arith.mulf %151, %155 : vector<8x32xf32>
    %c0_72 = arith.constant 0 : index
    %c0_73 = arith.constant 0 : index
    %c0_74 = arith.constant 0 : index
    %157 = vector.load %arg13[%c0_72, %c0_73, %c0_74] : memref<1x1x32xf32, #tpu.memory_space<vmem>>, vector<1x1x32xf32>
    %158 = vector.shape_cast %157 : vector<1x1x32xf32> to vector<1x32xf32>
    %159 = vector.broadcast %158 : vector<1x32xf32> to vector<8x32xf32>
    %160 = arith.mulf %156, %159 : vector<8x32xf32>
    %c0_75 = arith.constant 0 : index
    %c0_76 = arith.constant 0 : index
    %c0_77 = arith.constant 0 : index
    %161 = vector.load %arg14[%c0_75, %c0_76, %c0_77] : memref<1x1x32xf32, #tpu.memory_space<vmem>>, vector<1x1x32xf32>
    %162 = vector.shape_cast %161 : vector<1x1x32xf32> to vector<1x32xf32>
    %163 = vector.broadcast %162 : vector<1x32xf32> to vector<8x32xf32>
    %164 = arith.addf %160, %163 : vector<8x32xf32>
    %c0_78 = arith.constant 0 : index
    %c0_79 = arith.constant 0 : index
    %165 = vector.load %arg22[%c0_78, %c0_79] : memref<8x32xf32, #tpu.memory_space<vmem>>, vector<8x32xf32>
    tpu.vector_store %arg22[%c0_78, %c0_79], %164 {strides = array<i32>} : memref<8x32xf32, #tpu.memory_space<vmem>>, vector<8x32xf32>,
    %c1_i32 = arith.constant 1 : i32
    %166 = arith.cmpi eq, %arg1, %c1_i32 : i32
    %167 = arith.extui %166 : i1 to i32
    %c0_i32_80 = arith.constant 0 : i32
    %168 = arith.cmpi ne, %167, %c0_i32_80 : i32
    scf.if %168 {
      %cst_81 = arith.constant dense<0.000000e+00> : vector<8xf32>
      %169 = vector.multi_reduction <add>, %164, %cst_81 [1] : vector<8x32xf32> to vector<8xf32>
      %170 = vector.shape_cast %169 : vector<8xf32> to vector<8x1xf32>
      %cst_82 = arith.constant 3.200000e+01 : f32
      %171 = vector.broadcast %cst_82 : f32 to vector<8x1xf32>
      %172 = arith.divf %170, %171 : vector<8x1xf32>
      %173 = vector.broadcast %172 : vector<8x1xf32> to vector<8x32xf32>
      %174 = arith.subf %164, %173 : vector<8x32xf32>
      %175 = arith.mulf %174, %174 : vector<8x32xf32>
      %cst_83 = arith.constant dense<0.000000e+00> : vector<8xf32>
      %176 = vector.multi_reduction <add>, %175, %cst_83 [1] : vector<8x32xf32> to vector<8xf32>
      %177 = vector.shape_cast %176 : vector<8xf32> to vector<8x1xf32>
      %cst_84 = arith.constant 3.200000e+01 : f32
      %178 = vector.broadcast %cst_84 : f32 to vector<8x1xf32>
      %179 = arith.divf %177, %178 : vector<8x1xf32>
      %180 = vector.broadcast %172 : vector<8x1xf32> to vector<8x32xf32>
      %181 = arith.subf %164, %180 : vector<8x32xf32>
      %cst_85 = arith.constant 9.99999974E-6 : f32
      %182 = vector.broadcast %cst_85 : f32 to vector<8x1xf32>
      %183 = arith.addf %179, %182 : vector<8x1xf32>
      %184 = math.rsqrt %183 : vector<8x1xf32>
      %185 = vector.broadcast %184 : vector<8x1xf32> to vector<8x32xf32>
      %186 = arith.mulf %181, %185 : vector<8x32xf32>
      %c0_86 = arith.constant 0 : index
      %c0_87 = arith.constant 0 : index
      %187 = vector.load %arg15[%c0_86, %c0_87] : memref<1x32xf32, #tpu.memory_space<vmem>>, vector<1x32xf32>
      %188 = vector.broadcast %187 : vector<1x32xf32> to vector<8x32xf32>
      %189 = arith.mulf %186, %188 : vector<8x32xf32>
      %c0_88 = arith.constant 0 : index
      %c0_89 = arith.constant 0 : index
      %190 = vector.load %arg16[%c0_88, %c0_89] : memref<1x32xf32, #tpu.memory_space<vmem>>, vector<1x32xf32>
      %191 = vector.broadcast %190 : vector<1x32xf32> to vector<8x32xf32>
      %192 = arith.addf %189, %191 : vector<8x32xf32>
      %c0_90 = arith.constant 0 : index
      %c0_91 = arith.constant 0 : index
      %c0_92 = arith.constant 0 : index
      %193 = vector.load %arg18[%c0_90, %c0_91, %c0_92] : memref<1x8x32xf32, #tpu.memory_space<vmem>>, vector<1x8x32xf32>
      %194 = vector.shape_cast %193 : vector<1x8x32xf32> to vector<8x32xf32>
      %195 = vector.shape_cast %192 : vector<8x32xf32> to vector<1x8x32xf32>
      tpu.vector_store %arg18[%c0_90, %c0_91, %c0_92], %195 {strides = array<i32>} : memref<1x8x32xf32, #tpu.memory_space<vmem>>, vector<1x8x32xf32>,
    } else {
    }
    return
  }
  func.func @transform_0(%arg0: i32, %arg1: i32) -> (i32, i32, i32) {
    %c0_i32 = arith.constant 0 : i32
    %c0_i32_0 = arith.constant 0 : i32
    %c0_i32_1 = arith.constant 0 : i32
    return %arg0, %c0_i32, %c0_i32_0 : i32, i32, i32
  }
  func.func @transform_1(%arg0: i32, %arg1: i32) -> (i32, i32, i32) {
    %c0_i32 = arith.constant 0 : i32
    %c0_i32_0 = arith.constant 0 : i32
    %c0_i32_1 = arith.constant 0 : i32
    return %arg1, %c0_i32, %c0_i32_0 : i32, i32, i32
  }
  func.func @transform_2(%arg0: i32, %arg1: i32) -> (i32, i32, i32) {
    %c0_i32 = arith.constant 0 : i32
    %c0_i32_0 = arith.constant 0 : i32
    %c0_i32_1 = arith.constant 0 : i32
    return %arg1, %c0_i32, %c0_i32_0 : i32, i32, i32
  }
  func.func @transform_3(%arg0: i32, %arg1: i32) -> (i32, i32, i32) {
    %c0_i32 = arith.constant 0 : i32
    %c0_i32_0 = arith.constant 0 : i32
    %c0_i32_1 = arith.constant 0 : i32
    return %arg1, %c0_i32, %c0_i32_0 : i32, i32, i32
  }
  func.func @transform_4(%arg0: i32, %arg1: i32) -> (i32, i32, i32) {
    %c0_i32 = arith.constant 0 : i32
    %c0_i32_0 = arith.constant 0 : i32
    %c0_i32_1 = arith.constant 0 : i32
    return %arg1, %c0_i32, %c0_i32_0 : i32, i32, i32
  }
  func.func @transform_5(%arg0: i32, %arg1: i32) -> (i32, i32, i32) {
    %c0_i32 = arith.constant 0 : i32
    %c0_i32_0 = arith.constant 0 : i32
    %c0_i32_1 = arith.constant 0 : i32
    return %arg1, %c0_i32, %c0_i32_0 : i32, i32, i32
  }
  func.func @transform_6(%arg0: i32, %arg1: i32) -> (i32, i32, i32) {
    %c0_i32 = arith.constant 0 : i32
    %c0_i32_0 = arith.constant 0 : i32
    %c0_i32_1 = arith.constant 0 : i32
    return %arg1, %c0_i32, %c0_i32_0 : i32, i32, i32
  }
  func.func @transform_7(%arg0: i32, %arg1: i32) -> (i32, i32, i32) {
    %c0_i32 = arith.constant 0 : i32
    %c0_i32_0 = arith.constant 0 : i32
    %c0_i32_1 = arith.constant 0 : i32
    return %arg1, %c0_i32, %c0_i32_0 : i32, i32, i32
  }
  func.func @transform_8(%arg0: i32, %arg1: i32) -> (i32, i32, i32) {
    %c0_i32 = arith.constant 0 : i32
    %c0_i32_0 = arith.constant 0 : i32
    %c0_i32_1 = arith.constant 0 : i32
    return %arg1, %c0_i32, %c0_i32_0 : i32, i32, i32
  }
  func.func @transform_9(%arg0: i32, %arg1: i32) -> (i32, i32, i32) {
    %c0_i32 = arith.constant 0 : i32
    %c0_i32_0 = arith.constant 0 : i32
    %c0_i32_1 = arith.constant 0 : i32
    return %arg1, %c0_i32, %c0_i32_0 : i32, i32, i32
  }
  func.func @transform_10(%arg0: i32, %arg1: i32) -> (i32, i32, i32) {
    %c0_i32 = arith.constant 0 : i32
    %c0_i32_0 = arith.constant 0 : i32
    %c0_i32_1 = arith.constant 0 : i32
    return %arg1, %c0_i32, %c0_i32_0 : i32, i32, i32
  }
  func.func @transform_11(%arg0: i32, %arg1: i32) -> (i32, i32, i32) {
    %c0_i32 = arith.constant 0 : i32
    %c0_i32_0 = arith.constant 0 : i32
    %c0_i32_1 = arith.constant 0 : i32
    return %arg1, %c0_i32, %c0_i32_0 : i32, i32, i32
  }
  func.func @transform_12(%arg0: i32, %arg1: i32) -> (i32, i32, i32) {
    %c0_i32 = arith.constant 0 : i32
    %c0_i32_0 = arith.constant 0 : i32
    %c0_i32_1 = arith.constant 0 : i32
    return %arg1, %c0_i32, %c0_i32_0 : i32, i32, i32
  }
  func.func @transform_13(%arg0: i32, %arg1: i32) -> (i32, i32) {
    %c0_i32 = arith.constant 0 : i32
    %c0_i32_0 = arith.constant 0 : i32
    %c0_i32_1 = arith.constant 0 : i32
    return %c0_i32, %c0_i32_0 : i32, i32
  }
  func.func @transform_14(%arg0: i32, %arg1: i32) -> (i32, i32) {
    %c0_i32 = arith.constant 0 : i32
    %c0_i32_0 = arith.constant 0 : i32
    %c0_i32_1 = arith.constant 0 : i32
    return %c0_i32, %c0_i32_0 : i32, i32
  }
  func.func @transform_15(%arg0: i32, %arg1: i32) -> (i32, i32) {
    %c0_i32 = arith.constant 0 : i32
    %c0_i32_0 = arith.constant 0 : i32
    %c0_i32_1 = arith.constant 0 : i32
    return %c0_i32, %c0_i32_0 : i32, i32
  }
  func.func @transform_16(%arg0: i32, %arg1: i32) -> (i32, i32, i32) {
    %c0_i32 = arith.constant 0 : i32
    %c0_i32_0 = arith.constant 0 : i32
    %c0_i32_1 = arith.constant 0 : i32
    return %arg0, %c0_i32, %c0_i32_0 : i32, i32, i32
  }
  func.func @transform_17(%arg0: i32, %arg1: i32) -> (i32, i32, i32, i32) {
    %c2_i32 = arith.constant 2 : i32
    %0 = arith.muli %arg1, %c2_i32 : i32
    %1 = arith.addi %0, %arg0 : i32
    %c0_i32 = arith.constant 0 : i32
    %c0_i32_0 = arith.constant 0 : i32
    %c0_i32_1 = arith.constant 0 : i32
    %c0_i32_2 = arith.constant 0 : i32
    return %1, %c0_i32, %c0_i32_0, %c0_i32_1 : i32, i32, i32, i32
  }
  func.func @transform_18(%arg0: i32, %arg1: i32) -> (i32, i32, i32, i32) {
    %c2_i32 = arith.constant 2 : i32
    %0 = arith.muli %arg1, %c2_i32 : i32
    %1 = arith.addi %0, %arg0 : i32
    %c0_i32 = arith.constant 0 : i32
    %c0_i32_0 = arith.constant 0 : i32
    %c0_i32_1 = arith.constant 0 : i32
    %c0_i32_2 = arith.constant 0 : i32
    return %1, %c0_i32, %c0_i32_0, %c0_i32_1 : i32, i32, i32, i32
  }
  func.func @transform_19(%arg0: i32, %arg1: i32) -> (i32, i32, i32) {
    %c2_i32 = arith.constant 2 : i32
    %0 = arith.muli %arg1, %c2_i32 : i32
    %1 = arith.addi %0, %arg0 : i32
    %c0_i32 = arith.constant 0 : i32
    %c0_i32_0 = arith.constant 0 : i32
    %c0_i32_1 = arith.constant 0 : i32
    return %1, %c0_i32, %c0_i32_0 : i32, i32, i32
  }
}

</mosaic_0001>

<llo_original>
// kernel: tpu_custom_call.1
$region0: #{tpu_custom_call.1}
  #allocation0 [shape = 'u32[]', space=smem, size = 0x4, offset = 0x4, fixed_abs, tag = 'smem constant byte address 0x4 - core index']
  #allocation1 [shape = 'u32[72,128]{1,0:T(1,128)}', space=vmem, size = 0x9000, scoped, tag = 'internal scratch']
  #allocation2 [shape = 'f32[8,32]{1,0:T(8,128)}', space=vmem, size = 0x1000, scoped, tag = 'scratch operand']
  %s0 = inlined_call_operand.hbm [shape: f32[2,8,32], index: 0, kind: input, shape index: {}]
  %s1 = inlined_call_operand.vmem [shape: bf16[2,32,100], index: 1, kind: input, shape index: {}]
  %s2 = inlined_call_operand.hbm [shape: f32[2,1,100], index: 2, kind: input, shape index: {}]
  %s3 = inlined_call_operand.vmem [shape: bf16[2,32,32], index: 3, kind: input, shape index: {}]
  %s4 = inlined_call_operand.hbm [shape: f32[2,1,32], index: 4, kind: input, shape index: {}]
  %s5 = inlined_call_operand.vmem [shape: bf16[2,32,64], index: 5, kind: input, shape index: {}]
  %s6 = inlined_call_operand.hbm [shape: f32[2,1,64], index: 6, kind: input, shape index: {}]
  %s7 = inlined_call_operand.vmem [shape: bf16[2,64,32], index: 7, kind: input, shape index: {}]
  %s8 = inlined_call_operand.hbm [shape: f32[2,1,32], index: 8, kind: input, shape index: {}]
  %s9 = inlined_call_operand.hbm [shape: f32[2,1,32], index: 9, kind: input, shape index: {}]
  %s10 = inlined_call_operand.hbm [shape: f32[2,1,32], index: 10, kind: input, shape index: {}]
  %s11 = inlined_call_operand.hbm [shape: f32[2,1,32], index: 11, kind: input, shape index: {}]
  %s12 = inlined_call_operand.vmem [shape: f32[2,1,32], index: 12, kind: input, shape index: {}]
  %s13 = inlined_call_operand.vmem [shape: f32[1,32], index: 13, kind: input, shape index: {}]
  %s14 = inlined_call_operand.vmem [shape: f32[1,32], index: 14, kind: input, shape index: {}]
  %s15 = inlined_call_operand.vmem [shape: f32[8,8], index: 15, kind: input, shape index: {}]
  %s16 = inlined_call_operand.hbm [shape: f32[2,8,32], index: 16, kind: output, shape index: {0}]
  %s17 = inlined_call_operand.hbm [shape: f32[4,4,8,8], index: 17, kind: output, shape index: {1}]
  %s18 = inlined_call_operand.hbm [shape: f32[4,4,8,8], index: 18, kind: output, shape index: {2}]
  %s19 = inlined_call_operand.hbm [shape: f32[4,4,8], index: 19, kind: output, shape index: {3}]
  %20 = xla_tuple %s16, %s17, %s18, %s19
  %s21 = sld [smem:[#allocation0]]
  $region161: #{tpu_custom_call.1} parent=0
    _
  %s23 = ssub.s32 1, %s21
  %s24 = scalar_select 0, %s23, %s21
  $region1: #{tpu_custom_call.1} parent=0
    #allocation3 [shape = 'u8[8192]{0}', space=vmem, size = 0x2000, scoped, tag = 'input window, operand 0']
    #allocation4 [shape = 's32[2]{0}', space=sflag, size = 0x8, scoped, tag = 'scoped memory for tpu_custom_call.1']
    #allocation5 [shape = 's32[2]{0}', space=sflag, size = 0x8, scoped, tag = 'scoped memory for tpu_custom_call.1']
    #allocation6 [shape = 'u8[1024]{0}', space=vmem, size = 0x400, scoped, tag = 'input window, operand 2']
    #allocation7 [shape = 's32[2]{0}', space=sflag, size = 0x8, scoped, tag = 'scoped memory for tpu_custom_call.1']
    #allocation8 [shape = 'u8[1024]{0}', space=vmem, size = 0x400, scoped, tag = 'input window, operand 4']
    #allocation9 [shape = 'u8[1024]{0}', space=vmem, size = 0x400, scoped, tag = 'input window, operand 6']
    #allocation10 [shape = 's32[2]{0}', space=sflag, size = 0x8, scoped, tag = 'scoped memory for tpu_custom_call.1']
    #allocation11 [shape = 'u8[1024]{0}', space=vmem, size = 0x400, scoped, tag = 'input window, operand 8']
    #allocation12 [shape = 'u8[1024]{0}', space=vmem, size = 0x400, scoped, tag = 'input window, operand 9']
    #allocation13 [shape = 's32[2]{0}', space=sflag, size = 0x8, scoped, tag = 'scoped memory for tpu_custom_call.1']
    #allocation14 [shape = 'u8[1024]{0}', space=vmem, size = 0x400, scoped, tag = 'input window, operand 10']
    #allocation15 [shape = 'u8[1024]{0}', space=vmem, size = 0x400, scoped, tag = 'input window, operand 11']
    #allocation16 [shape = 's32[2]{0}', space=sflag, size = 0x8, scoped, tag = 'scoped memory for tpu_custom_call.1']
    #allocation17 [shape = 'u8[8192]{0}', space=vmem, size = 0x2000, scoped, tag = 'output window, operand 0']
    #allocation18 [shape = 'u8[32768]{0}', space=vmem, size = 0x8000, scoped, tag = 'output window, operand 1']
    #allocation19 [shape = 's32[2]{0}', space=sflag, size = 0x8, scoped, tag = 'scoped memory for tpu_custom_call.1']
    #allocation20 [shape = 'u8[32768]{0}', space=vmem, size = 0x8000, scoped, tag = 'output window, operand 2']
    #allocation21 [shape = 'u8[4096]{0}', space=vmem, size = 0x1000, scoped, tag = 'output window, operand 3']
    #allocation22 [shape = 's32[2]{0}', space=sflag, size = 0x8, scoped, tag = 'scoped memory for tpu_custom_call.1']
    %25 = vsyncpa [#allocation4], 0
    %s26 = scalar_lea.sflag [#allocation4], 1
    %27 = vsyncpa %s26, 0
    %28 = vsyncpa [#allocation7], 0
    %s29 = scalar_lea.sflag [#allocation7], 1
    %30 = vsyncpa %s29, 0
    %31 = vsyncpa [#allocation10], 0
    %s32 = scalar_lea.sflag [#allocation10], 1
    %33 = vsyncpa %s32, 0
    %34 = vsyncpa [#allocation13], 0
    %s35 = scalar_lea.sflag [#allocation13], 1
    %36 = vsyncpa %s35, 0
    %37 = vsyncpa [#allocation16], 0
    %s38 = scalar_lea.sflag [#allocation16], 1
    %39 = vsyncpa %s38, 0
    %40 = vsyncpa [#allocation5], 0
    %s41 = scalar_lea.sflag [#allocation5], 1
    %42 = vsyncpa %s41, 0
    %43 = vsyncpa [#allocation19], 0
    %s44 = scalar_lea.sflag [#allocation19], 1
    %45 = vsyncpa %s44, 0
    %46 = vsyncpa [#allocation22], 0
    %s47 = scalar_lea.sflag [#allocation22], 1
    %48 = vsyncpa %s47, 0
    loop: start=0, step=1, limit=6
    $region2: #{tpu_custom_call.1} parent=1 // loop_pre_header
      _
    $region3: #{tpu_custom_call.1} parent=1 // loop_header
      %s50 = sphi 0, %s54
      %p51 = scmp.ge.s32.totalorder %s50, 6
      %s57 = sphi 0, %s69
      %s58 = sphi 0, %s65
      %s59 = sphi 0, %s57
      %s60 = sphi 0, %s58
      %s61 = sphi 0, %s59
      %s62 = sphi 0, %s60
      %s72 = sphi 0, %s74
      %s75 = sphi 0, %s72
      %s76 = sphi 0, %s75
      %s92 = sphi 0, %s76
      %s98 = sphi 0, %s100
      %s101 = sphi 0, %s98
      %s102 = sphi 0, %s101
      %s118 = sphi 0, %s102
      %s124 = sphi 0, %s126
      %s127 = sphi 0, %s124
      %s128 = sphi 0, %s127
      %s144 = sphi 0, %s128
      %s150 = sphi 0, %s152
      %s153 = sphi 0, %s150
      %s154 = sphi 0, %s153
      %s170 = sphi 0, %s154
      %s176 = sphi 0, %s178
      %s179 = sphi 0, %s176
      %s180 = sphi 0, %s179
      %s196 = sphi 0, %s180
      %s202 = sphi 0, %s204
      %s205 = sphi 0, %s202
      %s206 = sphi 0, %s205
      %s222 = sphi 0, %s206
      %s228 = sphi 0, %s230
      %s231 = sphi 0, %s228
      %s232 = sphi 0, %s231
      %s248 = sphi 0, %s232
      %s254 = sphi 0, %s256
      %s257 = sphi 0, %s254
      %s258 = sphi 0, %s257
      %s274 = sphi 0, %s258
      %s280 = sphi 0, %s282
      %s283 = sphi 0, %s280
      %s284 = sphi 0, %s283
      %s300 = sphi 0, %s284
      %s306 = sphi 0, %s308
      %s309 = sphi 0, %s306
      %s310 = sphi 0, %s309
      %s326 = sphi 0, %s310
      %s332 = sphi 0, %s334
      %s335 = sphi 0, %s332
      %s336 = sphi 0, %s335
      %s352 = sphi 0, %s336
      %s358 = sphi 0, %s360
      %s361 = sphi 0, %s358
      %s362 = sphi 0, %s361
      %s378 = sphi 0, %s362
      %s384 = sphi 0, %s386
      %s387 = sphi 0, %s384
      %s388 = sphi 0, %s387
      %s404 = sphi 0, %s388
      %s408 = sphi 0, %s408
      %s410 = sphi 0, %s408
      %s411 = sphi 0, %s410
      %s425 = sphi 0, %s411
      %s429 = sphi 0, %s429
      %s431 = sphi 0, %s429
      %s432 = sphi 0, %s431
      %s446 = sphi 0, %s432
      %s450 = sphi 0, %s450
      %s452 = sphi 0, %s450
      %s453 = sphi 0, %s452
      %s467 = sphi 0, %s453
      %s473 = sphi 0, %s475
      %s476 = sphi 0, %s473
      %s477 = sphi 0, %s476
      %s493 = sphi 0, %s477
      %s503 = sphi 0, %s505
      %s506 = sphi 0, %s503
      %s507 = sphi 0, %s506
      %s523 = sphi 0, %s507
      %s533 = sphi 0, %s535
      %s536 = sphi 0, %s533
      %s537 = sphi 0, %s536
      %s553 = sphi 0, %s537
      %s563 = sphi 0, %s565
      %s566 = sphi 0, %s563
      %s567 = sphi 0, %s566
      %s583 = sphi 0, %s567
    $region4: #{tpu_custom_call.1} parent=1 // loop_header_branch
      %53 = sbr.rel (%p51) target = $region8
    $region5: #{tpu_custom_call.1} parent=1 // loop_body
      %s55 = ssub.s32 %s50, 1
      %s56 = ssub.s32 %s50, 2
      %s63 = sadd.s32 1, %s58
      %p64 = scmp.ge.s32.totalorder %s63, 2
      %s65 = scalar_select %p64, 0, %s63
      %s66 = sadd.s32 1, %s57
      %s67 = scalar_select %p64, %s66, %s57
      %p68 = scmp.ge.s32.totalorder %s67, 2
      %s69 = scalar_select %p68, 0, %s67
      %s70 = ssub.s32 %s57, %s69
      %p71 = scmp.eq.s32.totalorder %s70, 0
      %s73 = sadd.s32 %s72, 1
      %s74 = scalar_select %p71, %s72, %s73
      %p77 = pneg %p71
      %p78 = scmp.eq.s32.totalorder %s50, 3
      %p79 = por %p77, %p78
      %p80 = scmp.ne.s32.totalorder %s72, %s75
      %p81 = scmp.eq.s32.totalorder %s50, 0
      %p82 = por %p80, %p81
      %p83 = scmp.ne.s32.totalorder %s72, %s75
      %p84 = scmp.eq.s32.totalorder %s55, 3
      %p85 = por %p83, %p84
      %p86 = scmp.ne.s32.totalorder %s75, %s76
      %p87 = scmp.eq.s32.totalorder %s55, 0
      %p88 = por %p86, %p87
      %p89 = scmp.ne.s32.totalorder %s75, %s76
      %p90 = scmp.eq.s32.totalorder %s56, 3
      %p91 = por %p89, %p90
      %p93 = scmp.ne.s32.totalorder %s76, %s92
      %p94 = scmp.eq.s32.totalorder %s56, 0
      %p95 = por %p93, %p94
      %s96 = ssub.s32 %s58, %s65
      %p97 = scmp.eq.s32.totalorder %s96, 0
      %s99 = sadd.s32 %s98, 1
      %s100 = scalar_select %p97, %s98, %s99
      %p103 = pneg %p97
      %p104 = scmp.eq.s32.totalorder %s50, 3
      %p105 = por %p103, %p104
      %p106 = scmp.ne.s32.totalorder %s98, %s101
      %p107 = scmp.eq.s32.totalorder %s50, 0
      %p108 = por %p106, %p107
      %p109 = scmp.ne.s32.totalorder %s98, %s101
      %p110 = scmp.eq.s32.totalorder %s55, 3
      %p111 = por %p109, %p110
      %p112 = scmp.ne.s32.totalorder %s101, %s102
      %p113 = scmp.eq.s32.totalorder %s55, 0
      %p114 = por %p112, %p113
      %p115 = scmp.ne.s32.totalorder %s101, %s102
      %p116 = scmp.eq.s32.totalorder %s56, 3
      %p117 = por %p115, %p116
      %p119 = scmp.ne.s32.totalorder %s102, %s118
      %p120 = scmp.eq.s32.totalorder %s56, 0
      %p121 = por %p119, %p120
      %s122 = ssub.s32 %s58, %s65
      %p123 = scmp.eq.s32.totalorder %s122, 0
      %s125 = sadd.s32 %s124, 1
      %s126 = scalar_select %p123, %s124, %s125
      %p129 = pneg %p123
      %p130 = scmp.eq.s32.totalorder %s50, 3
      %p131 = por %p129, %p130
      %p132 = scmp.ne.s32.totalorder %s124, %s127
      %p133 = scmp.eq.s32.totalorder %s50, 0
      %p134 = por %p132, %p133
      %p135 = scmp.ne.s32.totalorder %s124, %s127
      %p136 = scmp.eq.s32.totalorder %s55, 3
      %p137 = por %p135, %p136
      %p138 = scmp.ne.s32.totalorder %s127, %s128
      %p139 = scmp.eq.s32.totalorder %s55, 0
      %p140 = por %p138, %p139
      %p141 = scmp.ne.s32.totalorder %s127, %s128
      %p142 = scmp.eq.s32.totalorder %s56, 3
      %p143 = por %p141, %p142
      %p145 = scmp.ne.s32.totalorder %s128, %s144
      %p146 = scmp.eq.s32.totalorder %s56, 0
      %p147 = por %p145, %p146
      %s148 = ssub.s32 %s58, %s65
      %p149 = scmp.eq.s32.totalorder %s148, 0
      %s151 = sadd.s32 %s150, 1
      %s152 = scalar_select %p149, %s150, %s151
      %p155 = pneg %p149
      %p156 = scmp.eq.s32.totalorder %s50, 3
      %p157 = por %p155, %p156
      %p158 = scmp.ne.s32.totalorder %s150, %s153
      %p159 = scmp.eq.s32.totalorder %s50, 0
      %p160 = por %p158, %p159
      %p161 = scmp.ne.s32.totalorder %s150, %s153
      %p162 = scmp.eq.s32.totalorder %s55, 3
      %p163 = por %p161, %p162
      %p164 = scmp.ne.s32.totalorder %s153, %s154
      %p165 = scmp.eq.s32.totalorder %s55, 0
      %p166 = por %p164, %p165
      %p167 = scmp.ne.s32.totalorder %s153, %s154
      %p168 = scmp.eq.s32.totalorder %s56, 3
      %p169 = por %p167, %p168
      %p171 = scmp.ne.s32.totalorder %s154, %s170
      %p172 = scmp.eq.s32.totalorder %s56, 0
      %p173 = por %p171, %p172
      %s174 = ssub.s32 %s58, %s65
      %p175 = scmp.eq.s32.totalorder %s174, 0
      %s177 = sadd.s32 %s176, 1
      %s178 = scalar_select %p175, %s176, %s177
      %p181 = pneg %p175
      %p182 = scmp.eq.s32.totalorder %s50, 3
      %p183 = por %p181, %p182
      %p184 = scmp.ne.s32.totalorder %s176, %s179
      %p185 = scmp.eq.s32.totalorder %s50, 0
      %p186 = por %p184, %p185
      %p187 = scmp.ne.s32.totalorder %s176, %s179
      %p188 = scmp.eq.s32.totalorder %s55, 3
      %p189 = por %p187, %p188
      %p190 = scmp.ne.s32.totalorder %s179, %s180
      %p191 = scmp.eq.s32.totalorder %s55, 0
      %p192 = por %p190, %p191
      %p193 = scmp.ne.s32.totalorder %s179, %s180
      %p194 = scmp.eq.s32.totalorder %s56, 3
      %p195 = por %p193, %p194
      %p197 = scmp.ne.s32.totalorder %s180, %s196
      %p198 = scmp.eq.s32.totalorder %s56, 0
      %p199 = por %p197, %p198
      %s200 = ssub.s32 %s58, %s65
      %p201 = scmp.eq.s32.totalorder %s200, 0
      %s203 = sadd.s32 %s202, 1
      %s204 = scalar_select %p201, %s202, %s203
      %p207 = pneg %p201
      %p208 = scmp.eq.s32.totalorder %s50, 3
      %p209 = por %p207, %p208
      %p210 = scmp.ne.s32.totalorder %s202, %s205
      %p211 = scmp.eq.s32.totalorder %s50, 0
      %p212 = por %p210, %p211
      %p213 = scmp.ne.s32.totalorder %s202, %s205
      %p214 = scmp.eq.s32.totalorder %s55, 3
      %p215 = por %p213, %p214
      %p216 = scmp.ne.s32.totalorder %s205, %s206
      %p217 = scmp.eq.s32.totalorder %s55, 0
      %p218 = por %p216, %p217
      %p219 = scmp.ne.s32.totalorder %s205, %s206
      %p220 = scmp.eq.s32.totalorder %s56, 3
      %p221 = por %p219, %p220
      %p223 = scmp.ne.s32.totalorder %s206, %s222
      %p224 = scmp.eq.s32.totalorder %s56, 0
      %p225 = por %p223, %p224
      %s226 = ssub.s32 %s58, %s65
      %p227 = scmp.eq.s32.totalorder %s226, 0
      %s229 = sadd.s32 %s228, 1
      %s230 = scalar_select %p227, %s228, %s229
      %p233 = pneg %p227
      %p234 = scmp.eq.s32.totalorder %s50, 3
      %p235 = por %p233, %p234
      %p236 = scmp.ne.s32.totalorder %s228, %s231
      %p237 = scmp.eq.s32.totalorder %s50, 0
      %p238 = por %p236, %p237
      %p239 = scmp.ne.s32.totalorder %s228, %s231
      %p240 = scmp.eq.s32.totalorder %s55, 3
      %p241 = por %p239, %p240
      %p242 = scmp.ne.s32.totalorder %s231, %s232
      %p243 = scmp.eq.s32.totalorder %s55, 0
      %p244 = por %p242, %p243
      %p245 = scmp.ne.s32.totalorder %s231, %s232
      %p246 = scmp.eq.s32.totalorder %s56, 3
      %p247 = por %p245, %p246
      %p249 = scmp.ne.s32.totalorder %s232, %s248
      %p250 = scmp.eq.s32.totalorder %s56, 0
      %p251 = por %p249, %p250
      %s252 = ssub.s32 %s58, %s65
      %p253 = scmp.eq.s32.totalorder %s252, 0
      %s255 = sadd.s32 %s254, 1
      %s256 = scalar_select %p253, %s254, %s255
      %p259 = pneg %p253
      %p260 = scmp.eq.s32.totalorder %s50, 3
      %p261 = por %p259, %p260
      %p262 = scmp.ne.s32.totalorder %s254, %s257
      %p263 = scmp.eq.s32.totalorder %s50, 0
      %p264 = por %p262, %p263
      %p265 = scmp.ne.s32.totalorder %s254, %s257
      %p266 = scmp.eq.s32.totalorder %s55, 3
      %p267 = por %p265, %p266
      %p268 = scmp.ne.s32.totalorder %s257, %s258
      %p269 = scmp.eq.s32.totalorder %s55, 0
      %p270 = por %p268, %p269
      %p271 = scmp.ne.s32.totalorder %s257, %s258
      %p272 = scmp.eq.s32.totalorder %s56, 3
      %p273 = por %p271, %p272
      %p275 = scmp.ne.s32.totalorder %s258, %s274
      %p276 = scmp.eq.s32.totalorder %s56, 0
      %p277 = por %p275, %p276
      %s278 = ssub.s32 %s58, %s65
      %p279 = scmp.eq.s32.totalorder %s278, 0
      %s281 = sadd.s32 %s280, 1
      %s282 = scalar_select %p279, %s280, %s281
      %p285 = pneg %p279
      %p286 = scmp.eq.s32.totalorder %s50, 3
      %p287 = por %p285, %p286
      %p288 = scmp.ne.s32.totalorder %s280, %s283
      %p289 = scmp.eq.s32.totalorder %s50, 0
      %p290 = por %p288, %p289
      %p291 = scmp.ne.s32.totalorder %s280, %s283
      %p292 = scmp.eq.s32.totalorder %s55, 3
      %p293 = por %p291, %p292
      %p294 = scmp.ne.s32.totalorder %s283, %s284
      %p295 = scmp.eq.s32.totalorder %s55, 0
      %p296 = por %p294, %p295
      %p297 = scmp.ne.s32.totalorder %s283, %s284
      %p298 = scmp.eq.s32.totalorder %s56, 3
      %p299 = por %p297, %p298
      %p301 = scmp.ne.s32.totalorder %s284, %s300
      %p302 = scmp.eq.s32.totalorder %s56, 0
      %p303 = por %p301, %p302
      %s304 = ssub.s32 %s58, %s65
      %p305 = scmp.eq.s32.totalorder %s304, 0
      %s307 = sadd.s32 %s306, 1
      %s308 = scalar_select %p305, %s306, %s307
      %p311 = pneg %p305
      %p312 = scmp.eq.s32.totalorder %s50, 3
      %p313 = por %p311, %p312
      %p314 = scmp.ne.s32.totalorder %s306, %s309
      %p315 = scmp.eq.s32.totalorder %s50, 0
      %p316 = por %p314, %p315
      %p317 = scmp.ne.s32.totalorder %s306, %s309
      %p318 = scmp.eq.s32.totalorder %s55, 3
      %p319 = por %p317, %p318
      %p320 = scmp.ne.s32.totalorder %s309, %s310
      %p321 = scmp.eq.s32.totalorder %s55, 0
      %p322 = por %p320, %p321
      %p323 = scmp.ne.s32.totalorder %s309, %s310
      %p324 = scmp.eq.s32.totalorder %s56, 3
      %p325 = por %p323, %p324
      %p327 = scmp.ne.s32.totalorder %s310, %s326
      %p328 = scmp.eq.s32.totalorder %s56, 0
      %p329 = por %p327, %p328
      %s330 = ssub.s32 %s58, %s65
      %p331 = scmp.eq.s32.totalorder %s330, 0
      %s333 = sadd.s32 %s332, 1
      %s334 = scalar_select %p331, %s332, %s333
      %p337 = pneg %p331
      %p338 = scmp.eq.s32.totalorder %s50, 3
      %p339 = por %p337, %p338
      %p340 = scmp.ne.s32.totalorder %s332, %s335
      %p341 = scmp.eq.s32.totalorder %s50, 0
      %p342 = por %p340, %p341
      %p343 = scmp.ne.s32.totalorder %s332, %s335
      %p344 = scmp.eq.s32.totalorder %s55, 3
      %p345 = por %p343, %p344
      %p346 = scmp.ne.s32.totalorder %s335, %s336
      %p347 = scmp.eq.s32.totalorder %s55, 0
      %p348 = por %p346, %p347
      %p349 = scmp.ne.s32.totalorder %s335, %s336
      %p350 = scmp.eq.s32.totalorder %s56, 3
      %p351 = por %p349, %p350
      %p353 = scmp.ne.s32.totalorder %s336, %s352
      %p354 = scmp.eq.s32.totalorder %s56, 0
      %p355 = por %p353, %p354
      %s356 = ssub.s32 %s58, %s65
      %p357 = scmp.eq.s32.totalorder %s356, 0
      %s359 = sadd.s32 %s358, 1
      %s360 = scalar_select %p357, %s358, %s359
      %p363 = pneg %p357
      %p364 = scmp.eq.s32.totalorder %s50, 3
      %p365 = por %p363, %p364
      %p366 = scmp.ne.s32.totalorder %s358, %s361
      %p367 = scmp.eq.s32.totalorder %s50, 0
      %p368 = por %p366, %p367
      %p369 = scmp.ne.s32.totalorder %s358, %s361
      %p370 = scmp.eq.s32.totalorder %s55, 3
      %p371 = por %p369, %p370
      %p372 = scmp.ne.s32.totalorder %s361, %s362
      %p373 = scmp.eq.s32.totalorder %s55, 0
      %p374 = por %p372, %p373
      %p375 = scmp.ne.s32.totalorder %s361, %s362
      %p376 = scmp.eq.s32.totalorder %s56, 3
      %p377 = por %p375, %p376
      %p379 = scmp.ne.s32.totalorder %s362, %s378
      %p380 = scmp.eq.s32.totalorder %s56, 0
      %p381 = por %p379, %p380
      %s382 = ssub.s32 %s58, %s65
      %p383 = scmp.eq.s32.totalorder %s382, 0
      %s385 = sadd.s32 %s384, 1
      %s386 = scalar_select %p383, %s384, %s385
      %p389 = pneg %p383
      %p390 = scmp.eq.s32.totalorder %s50, 3
      %p391 = por %p389, %p390
      %p392 = scmp.ne.s32.totalorder %s384, %s387
      %p393 = scmp.eq.s32.totalorder %s50, 0
      %p394 = por %p392, %p393
      %p395 = scmp.ne.s32.totalorder %s384, %s387
      %p396 = scmp.eq.s32.totalorder %s55, 3
      %p397 = por %p395, %p396
      %p398 = scmp.ne.s32.totalorder %s387, %s388
      %p399 = scmp.eq.s32.totalorder %s55, 0
      %p400 = por %p398, %p399
      %p401 = scmp.ne.s32.totalorder %s387, %s388
      %p402 = scmp.eq.s32.totalorder %s56, 3
      %p403 = por %p401, %p402
      %p405 = scmp.ne.s32.totalorder %s388, %s404
      %p406 = scmp.eq.s32.totalorder %s56, 0
      %p407 = por %p405, %p406
      %s409 = sadd.s32 %s408, 1
      %p412 = scmp.eq.s32.totalorder %s50, 3
      %p413 = scmp.ne.s32.totalorder %s408, %s410
      %p414 = scmp.eq.s32.totalorder %s50, 0
      %p415 = por %p413, %p414
      %p416 = scmp.ne.s32.totalorder %s408, %s410
      %p417 = scmp.eq.s32.totalorder %s55, 3
      %p418 = por %p416, %p417
      %p419 = scmp.ne.s32.totalorder %s410, %s411
      %p420 = scmp.eq.s32.totalorder %s55, 0
      %p421 = por %p419, %p420
      %p422 = scmp.ne.s32.totalorder %s410, %s411
      %p423 = scmp.eq.s32.totalorder %s56, 3
      %p424 = por %p422, %p423
      %p426 = scmp.ne.s32.totalorder %s411, %s425
      %p427 = scmp.eq.s32.totalorder %s56, 0
      %p428 = por %p426, %p427
      %s430 = sadd.s32 %s429, 1
      %p433 = scmp.eq.s32.totalorder %s50, 3
      %p434 = scmp.ne.s32.totalorder %s429, %s431
      %p435 = scmp.eq.s32.totalorder %s50, 0
      %p436 = por %p434, %p435
      %p437 = scmp.ne.s32.totalorder %s429, %s431
      %p438 = scmp.eq.s32.totalorder %s55, 3
      %p439 = por %p437, %p438
      %p440 = scmp.ne.s32.totalorder %s431, %s432
      %p441 = scmp.eq.s32.totalorder %s55, 0
      %p442 = por %p440, %p441
      %p443 = scmp.ne.s32.totalorder %s431, %s432
      %p444 = scmp.eq.s32.totalorder %s56, 3
      %p445 = por %p443, %p444
      %p447 = scmp.ne.s32.totalorder %s432, %s446
      %p448 = scmp.eq.s32.totalorder %s56, 0
      %p449 = por %p447, %p448
      %s451 = sadd.s32 %s450, 1
      %p454 = scmp.eq.s32.totalorder %s50, 3
      %p455 = scmp.ne.s32.totalorder %s450, %s452
      %p456 = scmp.eq.s32.totalorder %s50, 0
      %p457 = por %p455, %p456
      %p458 = scmp.ne.s32.totalorder %s450, %s452
      %p459 = scmp.eq.s32.totalorder %s55, 3
      %p460 = por %p458, %p459
      %p461 = scmp.ne.s32.totalorder %s452, %s453
      %p462 = scmp.eq.s32.totalorder %s55, 0
      %p463 = por %p461, %p462
      %p464 = scmp.ne.s32.totalorder %s452, %s453
      %p465 = scmp.eq.s32.totalorder %s56, 3
      %p466 = por %p464, %p465
      %p468 = scmp.ne.s32.totalorder %s453, %s467
      %p469 = scmp.eq.s32.totalorder %s56, 0
      %p470 = por %p468, %p469
      %s471 = ssub.s32 %s57, %s69
      %p472 = scmp.eq.s32.totalorder %s471, 0
      %s474 = sadd.s32 %s473, 1
      %s475 = scalar_select %p472, %s473, %s474
      %p478 = pneg %p472
      %p479 = scmp.eq.s32.totalorder %s50, 3
      %p480 = por %p478, %p479
      %p481 = scmp.ne.s32.totalorder %s473, %s476
      %p482 = scmp.eq.s32.totalorder %s50, 0
      %p483 = por %p481, %p482
      %p484 = scmp.ne.s32.totalorder %s473, %s476
      %p485 = scmp.eq.s32.totalorder %s55, 3
      %p486 = por %p484, %p485
      %p487 = scmp.ne.s32.totalorder %s476, %s477
      %p488 = scmp.eq.s32.totalorder %s55, 0
      %p489 = por %p487, %p488
      %p490 = scmp.ne.s32.totalorder %s476, %s477
      %p491 = scmp.eq.s32.totalorder %s56, 3
      %p492 = por %p490, %p491
      %p494 = scmp.ne.s32.totalorder %s477, %s493
      %p495 = scmp.eq.s32.totalorder %s56, 0
      %p496 = por %p494, %p495
      %s497 = smul.u32 %s58, 2
      %s498 = sadd.s32 %s497, %s57
      %s499 = smul.u32 %s65, 2
      %s500 = sadd.s32 %s499, %s69
      %s501 = ssub.s32 %s498, %s500
      %p502 = scmp.eq.s32.totalorder %s501, 0
      %s504 = sadd.s32 %s503, 1
      %s505 = scalar_select %p502, %s503, %s504
      %p508 = pneg %p502
      %p509 = scmp.eq.s32.totalorder %s50, 3
      %p510 = por %p508, %p509
      %p511 = scmp.ne.s32.totalorder %s503, %s506
      %p512 = scmp.eq.s32.totalorder %s50, 0
      %p513 = por %p511, %p512
      %p514 = scmp.ne.s32.totalorder %s503, %s506
      %p515 = scmp.eq.s32.totalorder %s55, 3
      %p516 = por %p514, %p515
      %p517 = scmp.ne.s32.totalorder %s506, %s507
      %p518 = scmp.eq.s32.totalorder %s55, 0
      %p519 = por %p517, %p518
      %p520 = scmp.ne.s32.totalorder %s506, %s507
      %p521 = scmp.eq.s32.totalorder %s56, 3
      %p522 = por %p520, %p521
      %p524 = scmp.ne.s32.totalorder %s507, %s523
      %p525 = scmp.eq.s32.totalorder %s56, 0
      %p526 = por %p524, %p525
      %s527 = smul.u32 %s58, 2
      %s528 = sadd.s32 %s527, %s57
      %s529 = smul.u32 %s65, 2
      %s530 = sadd.s32 %s529, %s69
      %s531 = ssub.s32 %s528, %s530
      %p532 = scmp.eq.s32.totalorder %s531, 0
      %s534 = sadd.s32 %s533, 1
      %s535 = scalar_select %p532, %s533, %s534
      %p538 = pneg %p532
      %p539 = scmp.eq.s32.totalorder %s50, 3
      %p540 = por %p538, %p539
      %p541 = scmp.ne.s32.totalorder %s533, %s536
      %p542 = scmp.eq.s32.totalorder %s50, 0
      %p543 = por %p541, %p542
      %p544 = scmp.ne.s32.totalorder %s533, %s536
      %p545 = scmp.eq.s32.totalorder %s55, 3
      %p546 = por %p544, %p545
      %p547 = scmp.ne.s32.totalorder %s536, %s537
      %p548 = scmp.eq.s32.totalorder %s55, 0
      %p549 = por %p547, %p548
      %p550 = scmp.ne.s32.totalorder %s536, %s537
      %p551 = scmp.eq.s32.totalorder %s56, 3
      %p552 = por %p550, %p551
      %p554 = scmp.ne.s32.totalorder %s537, %s553
      %p555 = scmp.eq.s32.totalorder %s56, 0
      %p556 = por %p554, %p555
      %s557 = smul.u32 %s58, 2
      %s558 = sadd.s32 %s557, %s57
      %s559 = smul.u32 %s65, 2
      %s560 = sadd.s32 %s559, %s69
      %s561 = ssub.s32 %s558, %s560
      %p562 = scmp.eq.s32.totalorder %s561, 0
      %s564 = sadd.s32 %s563, 1
      %s565 = scalar_select %p562, %s563, %s564
      %p568 = pneg %p562
      %p569 = scmp.eq.s32.totalorder %s50, 3
      %p570 = por %p568, %p569
      %p571 = scmp.ne.s32.totalorder %s563, %s566
      %p572 = scmp.eq.s32.totalorder %s50, 0
      %p573 = por %p571, %p572
      %p574 = scmp.ne.s32.totalorder %s563, %s566
      %p575 = scmp.eq.s32.totalorder %s55, 3
      %p576 = por %p574, %p575
      %p577 = scmp.ne.s32.totalorder %s566, %s567
      %p578 = scmp.eq.s32.totalorder %s55, 0
      %p579 = por %p577, %p578
      %p580 = scmp.ne.s32.totalorder %s566, %s567
      %p581 = scmp.eq.s32.totalorder %s56, 3
      %p582 = por %p580, %p581
      %p584 = scmp.ne.s32.totalorder %s567, %s583
      %p585 = scmp.eq.s32.totalorder %s56, 0
      %p586 = por %p584, %p585
      %p587 = scmp.le.s32.totalorder 1, %s50
      %p588 = scmp.lt.s32.totalorder %s50, 5
      %p589 = pnand %p587, %p588
      %p590 = pneg %p589
      // Predicated region
      $region9: #{tpu_custom_call.1} parent=5 // pred_check
        _
      $region10: #{tpu_custom_call.1} parent=5 // pred_check_branch
        %592 = sbr.rel (%p589) target = $region12
      $region11: #{tpu_custom_call.1} parent=5 // pred_region
        %s593 = ssub.s32 %s50, 1
        // Predicated region
        $region13: #{tpu_custom_call.1} parent=11 // pred_check
          %p594 = pneg %p421
        $region14: #{tpu_custom_call.1} parent=11 // pred_check_branch
          %596 = sbr.rel (%p594) target = $region16
        $region15: #{tpu_custom_call.1} parent=11 // pred_region
          _
        $region16: #{tpu_custom_call.1} parent=11 // pred_fallthru
          _
        // Predicated region
        $region17: #{tpu_custom_call.1} parent=11 // pred_check
          %p597 = pneg %p442
        $region18: #{tpu_custom_call.1} parent=11 // pred_check_branch
          %599 = sbr.rel (%p597) target = $region20
        $region19: #{tpu_custom_call.1} parent=11 // pred_region
          _
        $region20: #{tpu_custom_call.1} parent=11 // pred_fallthru
          _
        // Predicated region
        $region21: #{tpu_custom_call.1} parent=11 // pred_check
          %p600 = pneg %p463
        $region22: #{tpu_custom_call.1} parent=11 // pred_check_branch
          %602 = sbr.rel (%p600) target = $region24
        $region23: #{tpu_custom_call.1} parent=11 // pred_region
          _
        $region24: #{tpu_custom_call.1} parent=11 // pred_fallthru
          _
      $region12: #{tpu_custom_call.1} parent=5 // pred_fallthru
        _
      %p603 = scmp.lt.s32.totalorder %s50, 4
      // Predicated region
      $region25: #{tpu_custom_call.1} parent=5 // pred_check
        %p604 = pneg %p603
      $region26: #{tpu_custom_call.1} parent=5 // pred_check_branch
        %606 = sbr.rel (%p604) target = $region28
      $region27: #{tpu_custom_call.1} parent=5 // pred_region
        // Predicated region
        $region29: #{tpu_custom_call.1} parent=27 // pred_check
          %p607 = pneg %p82
        $region30: #{tpu_custom_call.1} parent=27 // pred_check_branch
          %609 = sbr.rel (%p607) target = $region32
        $region31: #{tpu_custom_call.1} parent=27 // pred_region
          %s610 = sand.u32 %s72, 1
          %s611 = scalar_lea.sflag [#allocation4], %s610
          %s612 = sand.u32 %s72, 1
          %s613 = smul.addr %s612, 8
          %s614 = scalar_lea.vmem [#allocation3], %s613
          %616 = vsyncadd %s611, 0
          %s617 = smul.addr %s57, 8
          %s618 = scalar_lea.hbm %s0, %s617
          %s620 = sshll.u32 %s618, 4
          %s621 = int_to_ptr.hbm [resolvable:$true] %s620
          %s622 = sshll.u32 %s614, 4
          %s623 = int_to_ptr.vmem [resolvable:$true] %s622
          %625 = dma.hbm_to_vmem [thread:$0]  %s621, 128, %s623, %s611
        $region32: #{tpu_custom_call.1} parent=27 // pred_fallthru
          _
        // Predicated region
        $region33: #{tpu_custom_call.1} parent=27 // pred_check
          %p626 = pneg %p108
        $region34: #{tpu_custom_call.1} parent=27 // pred_check_branch
          %628 = sbr.rel (%p626) target = $region36
        $region35: #{tpu_custom_call.1} parent=27 // pred_region
          %p629 = scmp.lt.s32.totalorder %s58, 1
          %s630 = scalar_select %p629, %s58, 1
          %s631 = smul.addr %s630, 4
          %s632 = smul.addr %s631, 4
          %s633 = scalar_lea.vmem %s1, %s632
        $region36: #{tpu_custom_call.1} parent=27 // pred_fallthru
          _
        // Predicated region
        $region37: #{tpu_custom_call.1} parent=27 // pred_check
          %p634 = pneg %p134
        $region38: #{tpu_custom_call.1} parent=27 // pred_check_branch
          %636 = sbr.rel (%p634) target = $region40
        $region39: #{tpu_custom_call.1} parent=27 // pred_region
          %s637 = sand.u32 %s50, 1
          %s638 = scalar_lea.sflag [#allocation7], %s637
          %s639 = sand.u32 %s124, 1
          %s640 = scalar_lea.vmem [#allocation6], %s639
          %642 = vsyncadd %s638, 0
          %s643 = scalar_lea.hbm %s2, %s58
          %s645 = sshll.u32 %s643, 4
          %s646 = int_to_ptr.hbm [resolvable:$true] %s645
          %s647 = sshll.u32 %s640, 4
          %s648 = int_to_ptr.vmem [resolvable:$true] %s647
          %650 = dma.hbm_to_vmem [thread:$0]  %s646, 16, %s648, %s638
        $region40: #{tpu_custom_call.1} parent=27 // pred_fallthru
          _
        // Predicated region
        $region41: #{tpu_custom_call.1} parent=27 // pred_check
          %p651 = pneg %p160
        $region42: #{tpu_custom_call.1} parent=27 // pred_check_branch
          %653 = sbr.rel (%p651) target = $region44
        $region43: #{tpu_custom_call.1} parent=27 // pred_region
          %p654 = scmp.lt.s32.totalorder %s58, 1
          %s655 = scalar_select %p654, %s58, 1
          %s656 = smul.addr %s655, 4
          %s657 = smul.addr %s656, 4
          %s658 = scalar_lea.vmem %s3, %s657
        $region44: #{tpu_custom_call.1} parent=27 // pred_fallthru
          _
        // Predicated region
        $region45: #{tpu_custom_call.1} parent=27 // pred_check
          %p659 = pneg %p186
        $region46: #{tpu_custom_call.1} parent=27 // pred_check_branch
          %661 = sbr.rel (%p659) target = $region48
        $region47: #{tpu_custom_call.1} parent=27 // pred_region
          %s662 = sand.u32 %s50, 1
          %s663 = scalar_lea.sflag [#allocation7], %s662
          %s664 = sand.u32 %s176, 1
          %s665 = scalar_lea.vmem [#allocation8], %s664
          %667 = vsyncadd %s663, 0
          %s668 = scalar_lea.hbm %s4, %s58
          %s670 = sshll.u32 %s668, 4
          %s671 = int_to_ptr.hbm [resolvable:$true] %s670
          %s672 = sshll.u32 %s665, 4
          %s673 = int_to_ptr.vmem [resolvable:$true] %s672
          %675 = dma.hbm_to_vmem [thread:$0]  %s671, 16, %s673, %s663
        $region48: #{tpu_custom_call.1} parent=27 // pred_fallthru
          _
        // Predicated region
        $region49: #{tpu_custom_call.1} parent=27 // pred_check
          %p676 = pneg %p212
        $region50: #{tpu_custom_call.1} parent=27 // pred_check_branch
          %678 = sbr.rel (%p676) target = $region52
        $region51: #{tpu_custom_call.1} parent=27 // pred_region
          %p679 = scmp.lt.s32.totalorder %s58, 1
          %s680 = scalar_select %p679, %s58, 1
          %s681 = smul.addr %s680, 4
          %s682 = smul.addr %s681, 4
          %s683 = scalar_lea.vmem %s5, %s682
        $region52: #{tpu_custom_call.1} parent=27 // pred_fallthru
          _
        // Predicated region
        $region53: #{tpu_custom_call.1} parent=27 // pred_check
          %p684 = pneg %p238
        $region54: #{tpu_custom_call.1} parent=27 // pred_check_branch
          %686 = sbr.rel (%p684) target = $region56
        $region55: #{tpu_custom_call.1} parent=27 // pred_region
          %s687 = sand.u32 %s50, 1
          %s688 = scalar_lea.sflag [#allocation10], %s687
          %s689 = sand.u32 %s228, 1
          %s690 = scalar_lea.vmem [#allocation9], %s689
          %692 = vsyncadd %s688, 0
          %s693 = scalar_lea.hbm %s6, %s58
          %s695 = sshll.u32 %s693, 4
          %s696 = int_to_ptr.hbm [resolvable:$true] %s695
          %s697 = sshll.u32 %s690, 4
          %s698 = int_to_ptr.vmem [resolvable:$true] %s697
          %700 = dma.hbm_to_vmem [thread:$0]  %s696, 16, %s698, %s688
        $region56: #{tpu_custom_call.1} parent=27 // pred_fallthru
          _
        // Predicated region
        $region57: #{tpu_custom_call.1} parent=27 // pred_check
          %p701 = pneg %p264
        $region58: #{tpu_custom_call.1} parent=27 // pred_check_branch
          %703 = sbr.rel (%p701) target = $region60
        $region59: #{tpu_custom_call.1} parent=27 // pred_region
          %p704 = scmp.lt.s32.totalorder %s58, 1
          %s705 = scalar_select %p704, %s58, 1
          %s706 = smul.addr %s705, 8
          %s707 = smul.addr %s706, 4
          %s708 = scalar_lea.vmem %s7, %s707
        $region60: #{tpu_custom_call.1} parent=27 // pred_fallthru
          _
        // Predicated region
        $region61: #{tpu_custom_call.1} parent=27 // pred_check
          %p709 = pneg %p290
        $region62: #{tpu_custom_call.1} parent=27 // pred_check_branch
          %711 = sbr.rel (%p709) target = $region64
        $region63: #{tpu_custom_call.1} parent=27 // pred_region
          %s712 = sand.u32 %s50, 1
          %s713 = scalar_lea.sflag [#allocation10], %s712
          %s714 = sand.u32 %s280, 1
          %s715 = scalar_lea.vmem [#allocation11], %s714
          %717 = vsyncadd %s713, 0
          %s718 = scalar_lea.hbm %s8, %s58
          %s720 = sshll.u32 %s718, 4
          %s721 = int_to_ptr.hbm [resolvable:$true] %s720
          %s722 = sshll.u32 %s715, 4
          %s723 = int_to_ptr.vmem [resolvable:$true] %s722
          %725 = dma.hbm_to_vmem [thread:$0]  %s721, 16, %s723, %s713
        $region64: #{tpu_custom_call.1} parent=27 // pred_fallthru
          _
        // Predicated region
        $region65: #{tpu_custom_call.1} parent=27 // pred_check
          %p726 = pneg %p316
        $region66: #{tpu_custom_call.1} parent=27 // pred_check_branch
          %728 = sbr.rel (%p726) target = $region68
        $region67: #{tpu_custom_call.1} parent=27 // pred_region
          %s729 = sand.u32 %s50, 1
          %s730 = scalar_lea.sflag [#allocation13], %s729
          %s731 = sand.u32 %s306, 1
          %s732 = scalar_lea.vmem [#allocation12], %s731
          %734 = vsyncadd %s730, 0
          %s735 = scalar_lea.hbm %s9, %s58
          %s737 = sshll.u32 %s735, 4
          %s738 = int_to_ptr.hbm [resolvable:$true] %s737
          %s739 = sshll.u32 %s732, 4
          %s740 = int_to_ptr.vmem [resolvable:$true] %s739
          %742 = dma.hbm_to_vmem [thread:$0]  %s738, 16, %s740, %s730
        $region68: #{tpu_custom_call.1} parent=27 // pred_fallthru
          _
        // Predicated region
        $region69: #{tpu_custom_call.1} parent=27 // pred_check
          %p743 = pneg %p342
        $region70: #{tpu_custom_call.1} parent=27 // pred_check_branch
          %745 = sbr.rel (%p743) target = $region72
        $region71: #{tpu_custom_call.1} parent=27 // pred_region
          %s746 = sand.u32 %s50, 1
          %s747 = scalar_lea.sflag [#allocation13], %s746
          %s748 = sand.u32 %s332, 1
          %s749 = scalar_lea.vmem [#allocation14], %s748
          %751 = vsyncadd %s747, 0
          %s752 = scalar_lea.hbm %s10, %s58
          %s754 = sshll.u32 %s752, 4
          %s755 = int_to_ptr.hbm [resolvable:$true] %s754
          %s756 = sshll.u32 %s749, 4
          %s757 = int_to_ptr.vmem [resolvable:$true] %s756
          %759 = dma.hbm_to_vmem [thread:$0]  %s755, 16, %s757, %s747
        $region72: #{tpu_custom_call.1} parent=27 // pred_fallthru
          _
        // Predicated region
        $region73: #{tpu_custom_call.1} parent=27 // pred_check
          %p760 = pneg %p368
        $region74: #{tpu_custom_call.1} parent=27 // pred_check_branch
          %762 = sbr.rel (%p760) target = $region76
        $region75: #{tpu_custom_call.1} parent=27 // pred_region
          %s763 = sand.u32 %s358, 1
          %s764 = scalar_lea.sflag [#allocation16], %s763
          %s765 = sand.u32 %s358, 1
          %s766 = scalar_lea.vmem [#allocation15], %s765
          %768 = vsyncadd %s764, 0
          %s769 = scalar_lea.hbm %s11, %s58
          %s771 = sshll.u32 %s769, 4
          %s772 = int_to_ptr.hbm [resolvable:$true] %s771
          %s773 = sshll.u32 %s766, 4
          %s774 = int_to_ptr.vmem [resolvable:$true] %s773
          %776 = dma.hbm_to_vmem [thread:$0]  %s772, 16, %s774, %s764
        $region76: #{tpu_custom_call.1} parent=27 // pred_fallthru
          _
        // Predicated region
        $region77: #{tpu_custom_call.1} parent=27 // pred_check
          %p777 = pneg %p394
        $region78: #{tpu_custom_call.1} parent=27 // pred_check_branch
          %779 = sbr.rel (%p777) target = $region80
        $region79: #{tpu_custom_call.1} parent=27 // pred_region
          %p780 = scmp.lt.s32.totalorder %s58, 1
          %s781 = scalar_select %p780, %s58, 1
          %s782 = scalar_lea.vmem %s12, %s781
        $region80: #{tpu_custom_call.1} parent=27 // pred_fallthru
          _
      $region28: #{tpu_custom_call.1} parent=5 // pred_fallthru
        _
      %p783 = scmp.le.s32.totalorder 1, %s50
      %p784 = scmp.lt.s32.totalorder %s50, 5
      %p785 = pnand %p783, %p784
      %p786 = pneg %p785
      // Predicated region
      $region81: #{tpu_custom_call.1} parent=5 // pred_check
        _
      $region82: #{tpu_custom_call.1} parent=5 // pred_check_branch
        %788 = sbr.rel (%p785) target = $region84
      $region83: #{tpu_custom_call.1} parent=5 // pred_region
        %s789 = ssub.s32 %s50, 1
        %s790 = sand.u32 %s75, 1
        %s791 = scalar_lea.sflag [#allocation4], %s790
        %s792 = sand.u32 %s75, 1
        %s793 = smul.addr %s792, 8
        %s794 = scalar_lea.vmem [#allocation3], %s793
        // Predicated region
        $region85: #{tpu_custom_call.1} parent=83 // pred_check
          %p795 = pneg %p88
        $region86: #{tpu_custom_call.1} parent=83 // pred_check_branch
          %797 = sbr.rel (%p795) target = $region88
        $region87: #{tpu_custom_call.1} parent=83 // pred_region
          %799 = dma.done %s791, 128
        $region88: #{tpu_custom_call.1} parent=83 // pred_fallthru
          _
        %s800 = sand.u32 %s55, 1
        %s801 = scalar_lea.sflag [#allocation7], %s800
        %s802 = sand.u32 %s127, 1
        %s803 = scalar_lea.vmem [#allocation6], %s802
        // Predicated region
        $region89: #{tpu_custom_call.1} parent=83 // pred_check
          %p804 = pneg %p140
        $region90: #{tpu_custom_call.1} parent=83 // pred_check_branch
          %806 = sbr.rel (%p804) target = $region92
        $region91: #{tpu_custom_call.1} parent=83 // pred_region
          %808 = dma.done %s801, 16
        $region92: #{tpu_custom_call.1} parent=83 // pred_fallthru
          _
        %s809 = sand.u32 %s55, 1
        %s810 = scalar_lea.sflag [#allocation7], %s809
        %s811 = sand.u32 %s179, 1
        %s812 = scalar_lea.vmem [#allocation8], %s811
        // Predicated region
        $region93: #{tpu_custom_call.1} parent=83 // pred_check
          %p813 = pneg %p192
        $region94: #{tpu_custom_call.1} parent=83 // pred_check_branch
          %815 = sbr.rel (%p813) target = $region96
        $region95: #{tpu_custom_call.1} parent=83 // pred_region
          %817 = dma.done %s810, 16
        $region96: #{tpu_custom_call.1} parent=83 // pred_fallthru
          _
        %s818 = sand.u32 %s55, 1
        %s819 = scalar_lea.sflag [#allocation10], %s818
        %s820 = sand.u32 %s231, 1
        %s821 = scalar_lea.vmem [#allocation9], %s820
        // Predicated region
        $region97: #{tpu_custom_call.1} parent=83 // pred_check
          %p822 = pneg %p244
        $region98: #{tpu_custom_call.1} parent=83 // pred_check_branch
          %824 = sbr.rel (%p822) target = $region100
        $region99: #{tpu_custom_call.1} parent=83 // pred_region
          %826 = dma.done %s819, 16
        $region100: #{tpu_custom_call.1} parent=83 // pred_fallthru
          _
        %s827 = sand.u32 %s55, 1
        %s828 = scalar_lea.sflag [#allocation10], %s827
        %s829 = sand.u32 %s283, 1
        %s830 = scalar_lea.vmem [#allocation11], %s829
        // Predicated region
        $region101: #{tpu_custom_call.1} parent=83 // pred_check
          %p831 = pneg %p296
        $region102: #{tpu_custom_call.1} parent=83 // pred_check_branch
          %833 = sbr.rel (%p831) target = $region104
        $region103: #{tpu_custom_call.1} parent=83 // pred_region
          %835 = dma.done %s828, 16
        $region104: #{tpu_custom_call.1} parent=83 // pred_fallthru
          _
        %s836 = sand.u32 %s55, 1
        %s837 = scalar_lea.sflag [#allocation13], %s836
        %s838 = sand.u32 %s309, 1
        %s839 = scalar_lea.vmem [#allocation12], %s838
        // Predicated region
        $region105: #{tpu_custom_call.1} parent=83 // pred_check
          %p840 = pneg %p322
        $region106: #{tpu_custom_call.1} parent=83 // pred_check_branch
          %842 = sbr.rel (%p840) target = $region108
        $region107: #{tpu_custom_call.1} parent=83 // pred_region
          %844 = dma.done %s837, 16
        $region108: #{tpu_custom_call.1} parent=83 // pred_fallthru
          _
        %s845 = sand.u32 %s55, 1
        %s846 = scalar_lea.sflag [#allocation13], %s845
        %s847 = sand.u32 %s335, 1
        %s848 = scalar_lea.vmem [#allocation14], %s847
        // Predicated region
        $region109: #{tpu_custom_call.1} parent=83 // pred_check
          %p849 = pneg %p348
        $region110: #{tpu_custom_call.1} parent=83 // pred_check_branch
          %851 = sbr.rel (%p849) target = $region112
        $region111: #{tpu_custom_call.1} parent=83 // pred_region
          %853 = dma.done %s846, 16
        $region112: #{tpu_custom_call.1} parent=83 // pred_fallthru
          _
        %s854 = sand.u32 %s361, 1
        %s855 = scalar_lea.sflag [#allocation16], %s854
        %s856 = sand.u32 %s361, 1
        %s857 = scalar_lea.vmem [#allocation15], %s856
        // Predicated region
        $region113: #{tpu_custom_call.1} parent=83 // pred_check
          %p858 = pneg %p374
        $region114: #{tpu_custom_call.1} parent=83 // pred_check_branch
          %860 = sbr.rel (%p858) target = $region116
        $region115: #{tpu_custom_call.1} parent=83 // pred_region
          %862 = dma.done %s855, 16
        $region116: #{tpu_custom_call.1} parent=83 // pred_fallthru
          _
        %s863 = sand.u32 %s75, 1
        %s864 = scalar_lea.sflag [#allocation4], %s863
        %s865 = sand.u32 %s75, 1
        %s866 = smul.addr %s865, 8
        %s867 = scalar_lea.vmem [#allocation3], %s866
        %p868 = pneg %p88
        %p869 = pneg %p85
        %p870 = scmp.lt.s32.totalorder %s60, 1
        %s871 = scalar_select %p870, %s60, 1
        %s872 = smul.addr %s871, 4
        %s873 = smul.addr %s872, 4
        %s874 = scalar_lea.vmem %s1, %s873
        %p875 = pneg %p114
        %p876 = pneg %p111
        %s877 = sand.u32 %s55, 1
        %s878 = scalar_lea.sflag [#allocation7], %s877
        %s879 = sand.u32 %s127, 1
        %s880 = scalar_lea.vmem [#allocation6], %s879
        %p881 = pneg %p140
        %p882 = pneg %p137
        %p883 = scmp.lt.s32.totalorder %s60, 1
        %s884 = scalar_select %p883, %s60, 1
        %s885 = smul.addr %s884, 4
        %s886 = smul.addr %s885, 4
        %s887 = scalar_lea.vmem %s3, %s886
        %p888 = pneg %p166
        %p889 = pneg %p163
        %s890 = sand.u32 %s55, 1
        %s891 = scalar_lea.sflag [#allocation7], %s890
        %s892 = sand.u32 %s179, 1
        %s893 = scalar_lea.vmem [#allocation8], %s892
        %p894 = pneg %p192
        %p895 = pneg %p189
        %p896 = scmp.lt.s32.totalorder %s60, 1
        %s897 = scalar_select %p896, %s60, 1
        %s898 = smul.addr %s897, 4
        %s899 = smul.addr %s898, 4
        %s900 = scalar_lea.vmem %s5, %s899
        %p901 = pneg %p218
        %p902 = pneg %p215
        %s903 = sand.u32 %s55, 1
        %s904 = scalar_lea.sflag [#allocation10], %s903
        %s905 = sand.u32 %s231, 1
        %s906 = scalar_lea.vmem [#allocation9], %s905
        %p907 = pneg %p244
        %p908 = pneg %p241
        %p909 = scmp.lt.s32.totalorder %s60, 1
        %s910 = scalar_select %p909, %s60, 1
        %s911 = smul.addr %s910, 8
        %s912 = smul.addr %s911, 4
        %s913 = scalar_lea.vmem %s7, %s912
        %p914 = pneg %p270
        %p915 = pneg %p267
        %s916 = sand.u32 %s55, 1
        %s917 = scalar_lea.sflag [#allocation10], %s916
        %s918 = sand.u32 %s283, 1
        %s919 = scalar_lea.vmem [#allocation11], %s918
        %p920 = pneg %p296
        %p921 = pneg %p293
        %s922 = sand.u32 %s55, 1
        %s923 = scalar_lea.sflag [#allocation13], %s922
        %s924 = sand.u32 %s309, 1
        %s925 = scalar_lea.vmem [#allocation12], %s924
        %p926 = pneg %p322
        %p927 = pneg %p319
        %s928 = sand.u32 %s55, 1
        %s929 = scalar_lea.sflag [#allocation13], %s928
        %s930 = sand.u32 %s335, 1
        %s931 = scalar_lea.vmem [#allocation14], %s930
        %p932 = pneg %p348
        %p933 = pneg %p345
        %s934 = sand.u32 %s361, 1
        %s935 = scalar_lea.sflag [#allocation16], %s934
        %s936 = sand.u32 %s361, 1
        %s937 = scalar_lea.vmem [#allocation15], %s936
        %p938 = pneg %p374
        %p939 = pneg %p371
        %p940 = scmp.lt.s32.totalorder %s60, 1
        %s941 = scalar_select %p940, %s60, 1
        %s942 = scalar_lea.vmem %s12, %s941
        %p943 = pneg %p400
        %p944 = pneg %p397
        %p945 = pneg %p421
        %p946 = pneg %p418
        %p947 = pneg %p442
        %p948 = pneg %p439
        %p949 = pneg %p463
        %p950 = pneg %p460
        %p951 = pneg %p489
        %p952 = pneg %p486
        %s953 = sand.u32 %s476, 1
        %s954 = scalar_lea.sflag [#allocation5], %s953
        %s955 = sand.u32 %s476, 1
        %s956 = smul.addr %s955, 8
        %s957 = scalar_lea.vmem [#allocation17], %s956
        %p958 = pneg %p519
        %p959 = pneg %p516
        %s960 = sand.u32 %s55, 1
        %s961 = scalar_lea.sflag [#allocation19], %s960
        %s962 = sand.u32 %s506, 1
        %s963 = smul.addr %s962, 32
        %s964 = scalar_lea.vmem [#allocation18], %s963
        %p965 = pneg %p549
        %p966 = pneg %p546
        %s967 = sand.u32 %s55, 1
        %s968 = scalar_lea.sflag [#allocation19], %s967
        %s969 = sand.u32 %s536, 1
        %s970 = smul.addr %s969, 32
        %s971 = scalar_lea.vmem [#allocation20], %s970
        %p972 = pneg %p579
        %p973 = pneg %p576
        %s974 = sand.u32 %s566, 1
        %s975 = scalar_lea.sflag [#allocation22], %s974
        %s976 = sand.u32 %s566, 1
        %s977 = smul.addr %s976, 4
        %s978 = scalar_lea.vmem [#allocation21], %s977
        %p979 = scmp.lt.s32.totalorder %s60, 1
        %s980 = scalar_select %p979, %s60, 1
        %s981 = smul.addr %s980, 4
        %s982 = smul.addr %s981, 4
        %s983 = scalar_lea.vmem %s1, %s982
        %p984 = scmp.lt.s32.totalorder %s60, 1
        %s985 = scalar_select %p984, %s60, 1
        %s986 = smul.addr %s985, 4
        %s987 = smul.addr %s986, 4
        %s988 = scalar_lea.vmem %s3, %s987
        %p989 = scmp.lt.s32.totalorder %s60, 1
        %s990 = scalar_select %p989, %s60, 1
        %s991 = smul.addr %s990, 4
        %s992 = smul.addr %s991, 4
        %s993 = scalar_lea.vmem %s5, %s992
        %p994 = scmp.lt.s32.totalorder %s60, 1
        %s995 = scalar_select %p994, %s60, 1
        %s996 = smul.addr %s995, 8
        %s997 = smul.addr %s996, 4
        %s998 = scalar_lea.vmem %s7, %s997
        %p999 = scmp.lt.s32.totalorder %s60, 1
        %s1000 = scalar_select %p999, %s60, 1
        %s1001 = scalar_lea.vmem %s12, %s1000
        %s1002 = smul.u32 %s60, 2
        %s1003 = sadd.s32 %s1002, %s59
        %s1004 = smul.u32 %s60, 2
        %s1005 = sadd.s32 %s1004, %s59
        %s1006 = smul.u32 %s60, 2
        %s1007 = sadd.s32 %s1006, %s59
        %p1009 = scmp.eq.s32.totalorder %s60, 0
        // Predicated region
        $region117: #{tpu_custom_call.1} parent=83 // pred_check
          %p1010 = pneg %p1009
        $region118: #{tpu_custom_call.1} parent=83 // pred_check_branch
          %1012 = sbr.rel (%p1010) target = $region120
        $region119: #{tpu_custom_call.1} parent=83 // pred_region
          %v1013 = vld [vmem:[%s794] sm:$0xff]
          %vm1014 = vcmask 261120
          %1015 = vst.msk [vmem:[#allocation2] sm:$0xff] %vm1014, %v1013
        $region120: #{tpu_custom_call.1} parent=83 // pred_fallthru
          _
        %v1016 = vld [vmem:[#allocation2] sm:$0xff]
        %v1017 = vpack.c.bf16 %v1016, %v1016
        %v1018 = vld [vmem:[%s983] sm:$0xf]
        %v1019 = vld [vmem:[%s983 + $0x4] sm:$0xf]
        %v1020 = vld [vmem:[%s983 + $0x8] sm:$0xf]
        %v1021 = vld [vmem:[%s983 + $0xc] sm:$0xf]
        %v1022 = vld [vmem:[%s803] sm:$0x1]
        %v1024 = vperm.slane %v1022, 0
        %v1030 = vunpack.c.l.b16 %v1018
        %v1031 = vunpack.c.l.b16 %v1019
        %v1032 = vunpack.c.l.b16 %v1020
        %v1033 = vunpack.c.l.b16 %v1021
        %v1034 = vpack.c.b16 %v1031, %v1030
        %v1035 = vpack.c.b16 %v1033, %v1032
        %vm1038 = vcmask 261120
        %v1040 = vsel %vm1038, %v1017, 0
        %1042 = vmatpush.bf16.msra.mxu0 0
        %1043 = vmatpush.bf16.msra.mxu0 0
        %1044 = vmatpush.bf16.msra.mxu0 0
        %1045 = vmatpush.bf16.msra.mxu0 0
        %1046 = vmatpush.bf16.msra.mxu0 0
        %1047 = vmatpush.bf16.msra.mxu0 0
        %1048 = vmatpush.bf16.msra.mxu0 %v1035
        %1049 = vmatpush.bf16.msra.mxu0 %v1034
        %1050 = vmatmul.bf16.gmra.mxu0 %v1040
        %v1051 = vpop.f32.mrf.mxu0
        %v1052 = vadd.f32 %v1024, %v1051
        %v1053 = vpop.f32.mrf.mxu0
        %1054 = vdwg.mxu0
        %v1055 = vmul.f32 %v1052, 0.35355338
        %1057 = vrot.lane.b32.xlu0 %v1055, 120
        %v1058 = vpop.permute.xlu0 %1057
        %1060 = vrot.lane.b32.xlu0 %v1055, 112
        %v1061 = vpop.permute.xlu0 %1060
        %1063 = vrot.lane.b32.xlu0 %v1055, 104
        %v1064 = vpop.permute.xlu0 %1063
        %v1066 = vrot.slane %v1061, 4
        %vm1067 = vcmask 1047556
        %v1068 = vsel %vm1067, %v1066, %v1055
        %v1069 = vrot.slane %v1055, 4
        %v1070 = vsel %vm1067, %v1061, %v1069
        %v1072 = vunpack.c.l.s4 1983009808
        %v1073 = vunpack.c.0.s8 %v1072
        %v1074 = vperm.slane %v1068, %v1073
        %v1076 = vunpack.c.l.s4 1983009808
        %v1077 = vunpack.c.0.s8 %v1076
        %v1078 = vperm.slane %v1070, %v1077
        %v1079 = vrot.slane %v1064, 4
        %v1080 = vsel %vm1067, %v1079, %v1058
        %v1081 = vrot.slane %v1058, 4
        %v1082 = vsel %vm1067, %v1064, %v1081
        %v1084 = vunpack.c.l.s4 1983009808
        %v1085 = vunpack.c.0.s8 %v1084
        %v1086 = vperm.slane %v1080, %v1085
        %v1088 = vunpack.c.l.s4 1983009808
        %v1089 = vunpack.c.0.s8 %v1088
        %v1090 = vperm.slane %v1082, %v1089
        %v1091 = vrot.slane %v1086, 4
        %v1092 = vsel %vm1067, %v1091, %v1074
        %v1093 = vrot.slane %v1074, 4
        %v1094 = vsel %vm1067, %v1086, %v1093
        %v1096 = vunpack.c.l.s4 1934713408
        %v1097 = vunpack.c.0.s8 %v1096
        %v1098 = vperm.slane %v1092, %v1097
        %v1100 = vunpack.c.l.s4 1934713408
        %v1101 = vunpack.c.0.s8 %v1100
        %v1102 = vperm.slane %v1094, %v1101
        %v1103 = vrot.slane %v1090, 4
        %v1104 = vsel %vm1067, %v1103, %v1078
        %v1105 = vrot.slane %v1078, 4
        %v1106 = vsel %vm1067, %v1090, %v1105
        %v1108 = vunpack.c.l.s4 1934713408
        %v1109 = vunpack.c.0.s8 %v1108
        %v1110 = vperm.slane %v1104, %v1109
        %v1112 = vunpack.c.l.s4 1934713408
        %v1113 = vunpack.c.0.s8 %v1112
        %v1114 = vperm.slane %v1106, %v1113
        %v1115 = vrot.slane %v1098, 4
        %v1116 = vsel %vm1067, 0.0, %v1115
        %v1117 = vrot.slane %v1102, 4
        %v1118 = vsel %vm1067, 0.0, %v1117
        %v1119 = vrot.slane %v1110, 4
        %v1120 = vsel %vm1067, 0.0, %v1119
        %v1121 = vrot.slane %v1114, 4
        %v1122 = vsel %vm1067, 0.0, %v1121
        %v1123 = vsel %vm1067, %v1117, %v1098
        %v1125 = vunpack.c.l.s4 1983009808
        %v1126 = vunpack.c.0.s8 %v1125
        %v1127 = vperm.slane %v1123, %v1126
        %v1128 = vrot.slane %v1118, 4
        %v1129 = vsel %vm1067, %v1128, %v1116
        %v1131 = vunpack.c.l.s4 1983009808
        %v1132 = vunpack.c.0.s8 %v1131
        %v1133 = vperm.slane %v1129, %v1132
        %v1134 = vsel %vm1067, %v1121, %v1110
        %v1136 = vunpack.c.l.s4 1983009808
        %v1137 = vunpack.c.0.s8 %v1136
        %v1138 = vperm.slane %v1134, %v1137
        %v1139 = vrot.slane %v1122, 4
        %v1140 = vsel %vm1067, %v1139, %v1120
        %v1142 = vunpack.c.l.s4 1983009808
        %v1143 = vunpack.c.0.s8 %v1142
        %v1144 = vperm.slane %v1140, %v1143
        %v1145 = vrot.slane %v1133, 4
        %v1146 = vsel %vm1067, %v1145, %v1127
        %v1147 = vrot.slane %v1127, 4
        %v1148 = vsel %vm1067, %v1133, %v1147
        %v1150 = vunpack.c.l.s4 1934713408
        %v1151 = vunpack.c.0.s8 %v1150
        %v1152 = vperm.slane %v1146, %v1151
        %v1154 = vunpack.c.l.s4 1934713408
        %v1155 = vunpack.c.0.s8 %v1154
        %v1156 = vperm.slane %v1148, %v1155
        %v1157 = vrot.slane %v1144, 4
        %v1158 = vsel %vm1067, %v1157, %v1138
        %v1159 = vrot.slane %v1138, 4
        %v1160 = vsel %vm1067, %v1144, %v1159
        %v1162 = vunpack.c.l.s4 1934713408
        %v1163 = vunpack.c.0.s8 %v1162
        %v1164 = vperm.slane %v1158, %v1163
        %v1166 = vunpack.c.l.s4 1934713408
        %v1167 = vunpack.c.0.s8 %v1166
        %v1168 = vperm.slane %v1160, %v1167
        %v1169 = vrot.slane %v1164, 4
        %v1170 = vsel %vm1067, %v1169, %v1152
        %v1171 = vrot.slane %v1152, 4
        %v1172 = vsel %vm1067, %v1164, %v1171
        %v1173 = vrot.slane %v1168, 4
        %v1174 = vsel %vm1067, %v1173, %v1156
        %v1175 = vrot.slane %v1156, 4
        %v1176 = vsel %vm1067, %v1168, %v1175
        %v1177 = vpack.c.bf16 %v1170, %v1170
        %v1178 = vpack.c.bf16 %v1172, %v1172
        %v1179 = vpack.c.bf16 %v1174, %v1174
        %v1180 = vpack.c.bf16 %v1176, %v1176
        %1182 = vrot.lane.b32.xlu0 %v1052, 120
        %v1183 = vpop.permute.xlu0 %1182
        %1184 = vrot.lane.b32.xlu0 %v1052, 112
        %v1185 = vpop.permute.xlu0 %1184
        %1186 = vrot.lane.b32.xlu0 %v1052, 104
        %v1187 = vpop.permute.xlu0 %1186
        %1188 = vrot.lane.b32.xlu0 %v1052, 96
        %v1189 = vpop.permute.xlu0 %1188
        %1190 = vrot.lane.b32.xlu0 %v1183, 96
        %v1191 = vpop.permute.xlu0 %1190
        %1192 = vrot.lane.b32.xlu0 %v1185, 96
        %v1193 = vpop.permute.xlu0 %1192
        %1194 = vrot.lane.b32.xlu0 %v1187, 96
        %v1195 = vpop.permute.xlu0 %1194
        %v1200 = vrot.slane %v1193, 4
        %v1201 = vsel %vm1067, %v1200, %v1189
        %v1202 = vrot.slane %v1189, 4
        %v1203 = vsel %vm1067, %v1193, %v1202
        %v1205 = vunpack.c.l.s4 1983009808
        %v1206 = vunpack.c.0.s8 %v1205
        %v1207 = vperm.slane %v1201, %v1206
        %v1209 = vunpack.c.l.s4 1983009808
        %v1210 = vunpack.c.0.s8 %v1209
        %v1211 = vperm.slane %v1203, %v1210
        %v1212 = vrot.slane %v1195, 4
        %v1213 = vsel %vm1067, %v1212, %v1191
        %v1214 = vrot.slane %v1191, 4
        %v1215 = vsel %vm1067, %v1195, %v1214
        %v1217 = vunpack.c.l.s4 1983009808
        %v1218 = vunpack.c.0.s8 %v1217
        %v1219 = vperm.slane %v1213, %v1218
        %v1221 = vunpack.c.l.s4 1983009808
        %v1222 = vunpack.c.0.s8 %v1221
        %v1223 = vperm.slane %v1215, %v1222
        %v1224 = vrot.slane %v1219, 4
        %v1225 = vsel %vm1067, %v1224, %v1207
        %v1226 = vrot.slane %v1207, 4
        %v1227 = vsel %vm1067, %v1219, %v1226
        %v1229 = vunpack.c.l.s4 1934713408
        %v1230 = vunpack.c.0.s8 %v1229
        %v1231 = vperm.slane %v1225, %v1230
        %v1233 = vunpack.c.l.s4 1934713408
        %v1234 = vunpack.c.0.s8 %v1233
        %v1235 = vperm.slane %v1227, %v1234
        %v1236 = vrot.slane %v1223, 4
        %v1237 = vsel %vm1067, %v1236, %v1211
        %v1238 = vrot.slane %v1211, 4
        %v1239 = vsel %vm1067, %v1223, %v1238
        %v1241 = vunpack.c.l.s4 1934713408
        %v1242 = vunpack.c.0.s8 %v1241
        %v1243 = vperm.slane %v1237, %v1242
        %v1245 = vunpack.c.l.s4 1934713408
        %v1246 = vunpack.c.0.s8 %v1245
        %v1247 = vperm.slane %v1239, %v1246
        %v1248 = vrot.slane %v1231, 4
        %v1249 = vsel %vm1067, 0.0, %v1248
        %v1250 = vrot.slane %v1235, 4
        %v1251 = vsel %vm1067, 0.0, %v1250
        %v1252 = vrot.slane %v1243, 4
        %v1253 = vsel %vm1067, 0.0, %v1252
        %v1254 = vrot.slane %v1247, 4
        %v1255 = vsel %vm1067, 0.0, %v1254
        %v1256 = vsel %vm1067, %v1250, %v1231
        %v1258 = vunpack.c.l.s4 1983009808
        %v1259 = vunpack.c.0.s8 %v1258
        %v1260 = vperm.slane %v1256, %v1259
        %v1261 = vrot.slane %v1251, 4
        %v1262 = vsel %vm1067, %v1261, %v1249
        %v1264 = vunpack.c.l.s4 1983009808
        %v1265 = vunpack.c.0.s8 %v1264
        %v1266 = vperm.slane %v1262, %v1265
        %v1267 = vsel %vm1067, %v1254, %v1243
        %v1269 = vunpack.c.l.s4 1983009808
        %v1270 = vunpack.c.0.s8 %v1269
        %v1271 = vperm.slane %v1267, %v1270
        %v1272 = vrot.slane %v1255, 4
        %v1273 = vsel %vm1067, %v1272, %v1253
        %v1275 = vunpack.c.l.s4 1983009808
        %v1276 = vunpack.c.0.s8 %v1275
        %v1277 = vperm.slane %v1273, %v1276
        %v1278 = vrot.slane %v1266, 4
        %v1279 = vsel %vm1067, %v1278, %v1260
        %v1280 = vrot.slane %v1260, 4
        %v1281 = vsel %vm1067, %v1266, %v1280
        %v1283 = vunpack.c.l.s4 1934713408
        %v1284 = vunpack.c.0.s8 %v1283
        %v1285 = vperm.slane %v1279, %v1284
        %v1287 = vunpack.c.l.s4 1934713408
        %v1288 = vunpack.c.0.s8 %v1287
        %v1289 = vperm.slane %v1281, %v1288
        %v1290 = vrot.slane %v1277, 4
        %v1291 = vsel %vm1067, %v1290, %v1271
        %v1292 = vrot.slane %v1271, 4
        %v1293 = vsel %vm1067, %v1277, %v1292
        %v1295 = vunpack.c.l.s4 1934713408
        %v1296 = vunpack.c.0.s8 %v1295
        %v1297 = vperm.slane %v1291, %v1296
        %v1299 = vunpack.c.l.s4 1934713408
        %v1300 = vunpack.c.0.s8 %v1299
        %v1301 = vperm.slane %v1293, %v1300
        %v1302 = vrot.slane %v1297, 4
        %v1303 = vsel %vm1067, %v1302, %v1285
        %v1304 = vrot.slane %v1285, 4
        %v1305 = vsel %vm1067, %v1297, %v1304
        %v1306 = vrot.slane %v1301, 4
        %v1307 = vsel %vm1067, %v1306, %v1289
        %v1308 = vrot.slane %v1289, 4
        %v1309 = vsel %vm1067, %v1301, %v1308
        %v1310 = vpack.c.bf16 %v1303, %v1303
        %v1311 = vpack.c.bf16 %v1305, %v1305
        %v1312 = vpack.c.bf16 %v1307, %v1307
        %v1313 = vpack.c.bf16 %v1309, %v1309
        %1314 = vrot.lane.b32.xlu0 %v1052, 64
        %v1315 = vpop.permute.xlu0 %1314
        %1316 = vrot.lane.b32.xlu0 %v1183, 64
        %v1317 = vpop.permute.xlu0 %1316
        %1318 = vrot.lane.b32.xlu0 %v1185, 64
        %v1319 = vpop.permute.xlu0 %1318
        %1320 = vrot.lane.b32.xlu0 %v1187, 64
        %v1321 = vpop.permute.xlu0 %1320
        %v1326 = vrot.slane %v1319, 4
        %v1327 = vsel %vm1067, %v1326, %v1315
        %v1328 = vrot.slane %v1315, 4
        %v1329 = vsel %vm1067, %v1319, %v1328
        %v1331 = vunpack.c.l.s4 1983009808
        %v1332 = vunpack.c.0.s8 %v1331
        %v1333 = vperm.slane %v1327, %v1332
        %v1335 = vunpack.c.l.s4 1983009808
        %v1336 = vunpack.c.0.s8 %v1335
        %v1337 = vperm.slane %v1329, %v1336
        %v1338 = vrot.slane %v1321, 4
        %v1339 = vsel %vm1067, %v1338, %v1317
        %v1340 = vrot.slane %v1317, 4
        %v1341 = vsel %vm1067, %v1321, %v1340
        %v1343 = vunpack.c.l.s4 1983009808
        %v1344 = vunpack.c.0.s8 %v1343
        %v1345 = vperm.slane %v1339, %v1344
        %v1347 = vunpack.c.l.s4 1983009808
        %v1348 = vunpack.c.0.s8 %v1347
        %v1349 = vperm.slane %v1341, %v1348
        %v1350 = vrot.slane %v1345, 4
        %v1351 = vsel %vm1067, %v1350, %v1333
        %v1352 = vrot.slane %v1333, 4
        %v1353 = vsel %vm1067, %v1345, %v1352
        %v1355 = vunpack.c.l.s4 1934713408
        %v1356 = vunpack.c.0.s8 %v1355
        %v1357 = vperm.slane %v1351, %v1356
        %v1359 = vunpack.c.l.s4 1934713408
        %v1360 = vunpack.c.0.s8 %v1359
        %v1361 = vperm.slane %v1353, %v1360
        %v1362 = vrot.slane %v1349, 4
        %v1363 = vsel %vm1067, %v1362, %v1337
        %v1364 = vrot.slane %v1337, 4
        %v1365 = vsel %vm1067, %v1349, %v1364
        %v1367 = vunpack.c.l.s4 1934713408
        %v1368 = vunpack.c.0.s8 %v1367
        %v1369 = vperm.slane %v1363, %v1368
        %v1371 = vunpack.c.l.s4 1934713408
        %v1372 = vunpack.c.0.s8 %v1371
        %v1373 = vperm.slane %v1365, %v1372
        %v1374 = vrot.slane %v1357, 4
        %v1375 = vsel %vm1067, 0.0, %v1374
        %v1376 = vrot.slane %v1361, 4
        %v1377 = vsel %vm1067, 0.0, %v1376
        %v1378 = vrot.slane %v1369, 4
        %v1379 = vsel %vm1067, 0.0, %v1378
        %v1380 = vrot.slane %v1373, 4
        %v1381 = vsel %vm1067, 0.0, %v1380
        %v1382 = vsel %vm1067, %v1376, %v1357
        %v1384 = vunpack.c.l.s4 1983009808
        %v1385 = vunpack.c.0.s8 %v1384
        %v1386 = vperm.slane %v1382, %v1385
        %v1387 = vrot.slane %v1377, 4
        %v1388 = vsel %vm1067, %v1387, %v1375
        %v1390 = vunpack.c.l.s4 1983009808
        %v1391 = vunpack.c.0.s8 %v1390
        %v1392 = vperm.slane %v1388, %v1391
        %v1393 = vsel %vm1067, %v1380, %v1369
        %v1395 = vunpack.c.l.s4 1983009808
        %v1396 = vunpack.c.0.s8 %v1395
        %v1397 = vperm.slane %v1393, %v1396
        %v1398 = vrot.slane %v1381, 4
        %v1399 = vsel %vm1067, %v1398, %v1379
        %v1401 = vunpack.c.l.s4 1983009808
        %v1402 = vunpack.c.0.s8 %v1401
        %v1403 = vperm.slane %v1399, %v1402
        %v1404 = vrot.slane %v1392, 4
        %v1405 = vsel %vm1067, %v1404, %v1386
        %v1406 = vrot.slane %v1386, 4
        %v1407 = vsel %vm1067, %v1392, %v1406
        %v1409 = vunpack.c.l.s4 1934713408
        %v1410 = vunpack.c.0.s8 %v1409
        %v1411 = vperm.slane %v1405, %v1410
        %v1413 = vunpack.c.l.s4 1934713408
        %v1414 = vunpack.c.0.s8 %v1413
        %v1415 = vperm.slane %v1407, %v1414
        %v1416 = vrot.slane %v1403, 4
        %v1417 = vsel %vm1067, %v1416, %v1397
        %v1418 = vrot.slane %v1397, 4
        %v1419 = vsel %vm1067, %v1403, %v1418
        %v1421 = vunpack.c.l.s4 1934713408
        %v1422 = vunpack.c.0.s8 %v1421
        %v1423 = vperm.slane %v1417, %v1422
        %v1425 = vunpack.c.l.s4 1934713408
        %v1426 = vunpack.c.0.s8 %v1425
        %v1427 = vperm.slane %v1419, %v1426
        %v1428 = vrot.slane %v1423, 4
        %v1429 = vsel %vm1067, %v1428, %v1411
        %v1430 = vrot.slane %v1411, 4
        %v1431 = vsel %vm1067, %v1423, %v1430
        %v1432 = vrot.slane %v1427, 4
        %v1433 = vsel %vm1067, %v1432, %v1415
        %v1434 = vrot.slane %v1415, 4
        %v1435 = vsel %vm1067, %v1427, %v1434
        %v1436 = vpack.c.bf16 %v1429, %v1429
        %v1437 = vpack.c.bf16 %v1431, %v1431
        %v1438 = vpack.c.bf16 %v1433, %v1433
        %v1439 = vpack.c.bf16 %v1435, %v1435
        %vm1440 = vcmask 64512
        %v1442 = vsel %vm1440, %v1177, 0
        %v1445 = vsel %vm1440, %v1310, 0
        %1447 = vmatpush.bf16.xpose.msra.mxu0 0
        %1448 = vmatpush.bf16.xpose.msra.mxu0 0
        %1449 = vmatpush.bf16.xpose.msra.mxu0 0
        %1450 = vmatpush.bf16.xpose.msra.mxu0 0
        %1451 = vmatpush.bf16.xpose.msra.mxu0 0
        %1452 = vmatpush.bf16.xpose.msra.mxu0 0
        %1453 = vmatpush.bf16.xpose.msra.mxu0 0
        %1454 = vmatpush.bf16.xpose.msra.mxu0 %v1445
        %1455 = vmatmul.bf16.gmra.mxu0 %v1442
        %v1456 = vpop.f32.mrf.mxu0
        %v1457 = vadd.f32 0.0, %v1456
        %v1458 = vpop.f32.mrf.mxu0
        %1459 = vdwg.mxu0
        %v1461 = vsel %vm1440, %v1178, 0
        %v1464 = vsel %vm1440, %v1311, 0
        %1466 = vmatpush.bf16.xpose.msra.mxu0 0
        %1467 = vmatpush.bf16.xpose.msra.mxu0 0
        %1468 = vmatpush.bf16.xpose.msra.mxu0 0
        %1469 = vmatpush.bf16.xpose.msra.mxu0 0
        %1470 = vmatpush.bf16.xpose.msra.mxu0 0
        %1471 = vmatpush.bf16.xpose.msra.mxu0 0
        %1472 = vmatpush.bf16.xpose.msra.mxu0 0
        %1473 = vmatpush.bf16.xpose.msra.mxu0 %v1464
        %1474 = vmatmul.bf16.gmra.mxu0 %v1461
        %v1475 = vpop.f32.mrf.mxu0
        %v1476 = vadd.f32 0.0, %v1475
        %v1477 = vpop.f32.mrf.mxu0
        %1478 = vdwg.mxu0
        %v1480 = vsel %vm1440, %v1179, 0
        %v1483 = vsel %vm1440, %v1312, 0
        %1485 = vmatpush.bf16.xpose.msra.mxu0 0
        %1486 = vmatpush.bf16.xpose.msra.mxu0 0
        %1487 = vmatpush.bf16.xpose.msra.mxu0 0
        %1488 = vmatpush.bf16.xpose.msra.mxu0 0
        %1489 = vmatpush.bf16.xpose.msra.mxu0 0
        %1490 = vmatpush.bf16.xpose.msra.mxu0 0
        %1491 = vmatpush.bf16.xpose.msra.mxu0 0
        %1492 = vmatpush.bf16.xpose.msra.mxu0 %v1483
        %1493 = vmatmul.bf16.gmra.mxu0 %v1480
        %v1494 = vpop.f32.mrf.mxu0
        %v1495 = vadd.f32 0.0, %v1494
        %v1496 = vpop.f32.mrf.mxu0
        %1497 = vdwg.mxu0
        %v1499 = vsel %vm1440, %v1180, 0
        %v1502 = vsel %vm1440, %v1313, 0
        %1504 = vmatpush.bf16.xpose.msra.mxu0 0
        %1505 = vmatpush.bf16.xpose.msra.mxu0 0
        %1506 = vmatpush.bf16.xpose.msra.mxu0 0
        %1507 = vmatpush.bf16.xpose.msra.mxu0 0
        %1508 = vmatpush.bf16.xpose.msra.mxu0 0
        %1509 = vmatpush.bf16.xpose.msra.mxu0 0
        %1510 = vmatpush.bf16.xpose.msra.mxu0 0
        %1511 = vmatpush.bf16.xpose.msra.mxu0 %v1502
        %1512 = vmatmul.bf16.gmra.mxu0 %v1499
        %v1513 = vpop.f32.mrf.mxu0
        %v1514 = vadd.f32 0.0, %v1513
        %v1515 = vpop.f32.mrf.mxu0
        %1516 = vdwg.mxu0
        %v1517 = vsel %vm1440, %v1457, -inf
        %1518 = vmax.xlane.f32.xlu0 %v1517
        %v1519 = vpop.xlane.xlu0 %1518
        %v1520 = vsel %vm1440, %v1476, -inf
        %1521 = vmax.xlane.f32.xlu0 %v1520
        %v1522 = vpop.xlane.xlu0 %1521
        %v1523 = vsel %vm1440, %v1495, -inf
        %1524 = vmax.xlane.f32.xlu0 %v1523
        %v1525 = vpop.xlane.xlu0 %1524
        %v1526 = vsel %vm1440, %v1514, -inf
        %1527 = vmax.xlane.f32.xlu0 %v1526
        %v1528 = vpop.xlane.xlu0 %1527
        %v1529 = vsub.f32 %v1457, %v1519
        %v1530 = vsub.f32 %v1476, %v1522
        %v1531 = vsub.f32 %v1495, %v1525
        %v1532 = vsub.f32 %v1514, %v1528
        %v1533 = vmul.f32 %v1529, 1.442695
        %v1534 = vpow.pop %v1533
        %v1535 = vmul.f32 %v1530, 1.442695
        %v1536 = vpow.pop %v1535
        %v1537 = vmul.f32 %v1531, 1.442695
        %v1538 = vpow.pop %v1537
        %v1539 = vmul.f32 %v1532, 1.442695
        %v1540 = vpow.pop %v1539
        %v1541 = vsel %vm1440, %v1534, 0.0
        %1542 = vadd.xlane.f32.xlu0 %v1541
        %v1543 = vpop.xlane.xlu0 %1542
        %v1544 = vsel %vm1440, %v1536, 0.0
        %1545 = vadd.xlane.f32.xlu0 %v1544
        %v1546 = vpop.xlane.xlu0 %1545
        %v1547 = vsel %vm1440, %v1538, 0.0
        %1548 = vadd.xlane.f32.xlu0 %v1547
        %v1549 = vpop.xlane.xlu0 %1548
        %v1550 = vsel %vm1440, %v1540, 0.0
        %1551 = vadd.xlane.f32.xlu0 %v1550
        %v1552 = vpop.xlane.xlu0 %1551
        %v1553 = vrcp.pop %v1543
        %v1554 = vrcp.pop %v1546
        %v1555 = vrcp.pop %v1549
        %v1556 = vrcp.pop %v1552
        %v1557 = vmul.f32 %v1534, %v1553
        %v1558 = vmul.f32 %v1536, %v1554
        %v1559 = vmul.f32 %v1538, %v1555
        %v1560 = vmul.f32 %v1540, %v1556
        %1561 = vst.msk [vmem:[%s964] sm:$0xff] %vm1440, %v1557
        %1562 = vst.msk [vmem:[%s964 + $0x8] sm:$0xff] %vm1440, %v1558
        %1563 = vst.msk [vmem:[%s964 + $0x10] sm:$0xff] %vm1440, %v1559
        %1564 = vst.msk [vmem:[%s964 + $0x18] sm:$0xff] %vm1440, %v1560
        %v1565 = vpack.c.bf16 %v1557, %v1557
        %v1566 = vpack.c.bf16 %v1558, %v1558
        %v1567 = vpack.c.bf16 %v1559, %v1559
        %v1568 = vpack.c.bf16 %v1560, %v1560
        %v1570 = vsel %vm1440, %v1565, 0
        %vm1572 = vcmask 1043456
        %v1574 = vsel %vm1572, %v1436, 0
        %1576 = vmatpush.bf16.msra.mxu0 0
        %1577 = vmatpush.bf16.msra.mxu0 0
        %1578 = vmatpush.bf16.msra.mxu0 0
        %1579 = vmatpush.bf16.msra.mxu0 0
        %1580 = vmatpush.bf16.msra.mxu0 0
        %1581 = vmatpush.bf16.msra.mxu0 0
        %1582 = vmatpush.bf16.msra.mxu0 0
        %1583 = vmatpush.bf16.msra.mxu0 %v1574
        %1584 = vmatmul.bf16.gmra.mxu0 %v1570
        %v1585 = vpop.f32.mrf.mxu0
        %v1586 = vadd.f32 0.0, %v1585
        %v1587 = vpop.f32.mrf.mxu0
        %1588 = vdwg.mxu0
        %v1590 = vsel %vm1440, %v1566, 0
        %v1593 = vsel %vm1572, %v1437, 0
        %1595 = vmatpush.bf16.msra.mxu0 0
        %1596 = vmatpush.bf16.msra.mxu0 0
        %1597 = vmatpush.bf16.msra.mxu0 0
        %1598 = vmatpush.bf16.msra.mxu0 0
        %1599 = vmatpush.bf16.msra.mxu0 0
        %1600 = vmatpush.bf16.msra.mxu0 0
        %1601 = vmatpush.bf16.msra.mxu0 0
        %1602 = vmatpush.bf16.msra.mxu0 %v1593
        %1603 = vmatmul.bf16.gmra.mxu0 %v1590
        %v1604 = vpop.f32.mrf.mxu0
        %v1605 = vadd.f32 0.0, %v1604
        %v1606 = vpop.f32.mrf.mxu0
        %1607 = vdwg.mxu0
        %v1609 = vsel %vm1440, %v1567, 0
        %v1612 = vsel %vm1572, %v1438, 0
        %1614 = vmatpush.bf16.msra.mxu0 0
        %1615 = vmatpush.bf16.msra.mxu0 0
        %1616 = vmatpush.bf16.msra.mxu0 0
        %1617 = vmatpush.bf16.msra.mxu0 0
        %1618 = vmatpush.bf16.msra.mxu0 0
        %1619 = vmatpush.bf16.msra.mxu0 0
        %1620 = vmatpush.bf16.msra.mxu0 0
        %1621 = vmatpush.bf16.msra.mxu0 %v1612
        %1622 = vmatmul.bf16.gmra.mxu0 %v1609
        %v1623 = vpop.f32.mrf.mxu0
        %v1624 = vadd.f32 0.0, %v1623
        %v1625 = vpop.f32.mrf.mxu0
        %1626 = vdwg.mxu0
        %v1628 = vsel %vm1440, %v1568, 0
        %v1631 = vsel %vm1572, %v1439, 0
        %1633 = vmatpush.bf16.msra.mxu0 0
        %1634 = vmatpush.bf16.msra.mxu0 0
        %1635 = vmatpush.bf16.msra.mxu0 0
        %1636 = vmatpush.bf16.msra.mxu0 0
        %1637 = vmatpush.bf16.msra.mxu0 0
        %1638 = vmatpush.bf16.msra.mxu0 0
        %1639 = vmatpush.bf16.msra.mxu0 0
        %1640 = vmatpush.bf16.msra.mxu0 %v1631
        %1641 = vmatmul.bf16.gmra.mxu0 %v1628
        %v1642 = vpop.f32.mrf.mxu0
        %v1643 = vadd.f32 0.0, %v1642
        %v1644 = vpop.f32.mrf.mxu0
        %1645 = vdwg.mxu0
        %v1646 = vrot.slane %v1624, 4
        %v1647 = vsel %vm1067, %v1646, %v1586
        %v1648 = vrot.slane %v1586, 4
        %v1649 = vsel %vm1067, %v1624, %v1648
        %v1651 = vunpack.c.l.s4 1983009808
        %v1652 = vunpack.c.0.s8 %v1651
        %v1653 = vperm.slane %v1647, %v1652
        %v1655 = vunpack.c.l.s4 1983009808
        %v1656 = vunpack.c.0.s8 %v1655
        %v1657 = vperm.slane %v1649, %v1656
        %v1658 = vrot.slane %v1643, 4
        %v1659 = vsel %vm1067, %v1658, %v1605
        %v1660 = vrot.slane %v1605, 4
        %v1661 = vsel %vm1067, %v1643, %v1660
        %v1663 = vunpack.c.l.s4 1983009808
        %v1664 = vunpack.c.0.s8 %v1663
        %v1665 = vperm.slane %v1659, %v1664
        %v1667 = vunpack.c.l.s4 1983009808
        %v1668 = vunpack.c.0.s8 %v1667
        %v1669 = vperm.slane %v1661, %v1668
        %v1670 = vrot.slane %v1665, 4
        %v1671 = vsel %vm1067, %v1670, %v1653
        %v1672 = vrot.slane %v1653, 4
        %v1673 = vsel %vm1067, %v1665, %v1672
        %v1675 = vunpack.c.l.s4 1934713408
        %v1676 = vunpack.c.0.s8 %v1675
        %v1677 = vperm.slane %v1671, %v1676
        %v1679 = vunpack.c.l.s4 1934713408
        %v1680 = vunpack.c.0.s8 %v1679
        %v1681 = vperm.slane %v1673, %v1680
        %v1682 = vrot.slane %v1669, 4
        %v1683 = vsel %vm1067, %v1682, %v1657
        %v1684 = vrot.slane %v1657, 4
        %v1685 = vsel %vm1067, %v1669, %v1684
        %v1687 = vunpack.c.l.s4 1934713408
        %v1688 = vunpack.c.0.s8 %v1687
        %v1689 = vperm.slane %v1683, %v1688
        %v1691 = vunpack.c.l.s4 1934713408
        %v1692 = vunpack.c.0.s8 %v1691
        %v1693 = vperm.slane %v1685, %v1692
        %v1694 = vrot.slane %v1677, 4
        %v1695 = vsel %vm1067, 0.0, %v1694
        %v1696 = vrot.slane %v1681, 4
        %v1697 = vsel %vm1067, 0.0, %v1696
        %v1698 = vrot.slane %v1689, 4
        %v1699 = vsel %vm1067, 0.0, %v1698
        %v1700 = vrot.slane %v1693, 4
        %v1701 = vsel %vm1067, 0.0, %v1700
        %v1702 = vsel %vm1067, %v1696, %v1677
        %v1704 = vunpack.c.l.s4 1983009808
        %v1705 = vunpack.c.0.s8 %v1704
        %v1706 = vperm.slane %v1702, %v1705
        %v1707 = vrot.slane %v1697, 4
        %v1708 = vsel %vm1067, %v1707, %v1695
        %v1710 = vunpack.c.l.s4 1983009808
        %v1711 = vunpack.c.0.s8 %v1710
        %v1712 = vperm.slane %v1708, %v1711
        %v1713 = vsel %vm1067, %v1700, %v1689
        %v1715 = vunpack.c.l.s4 1983009808
        %v1716 = vunpack.c.0.s8 %v1715
        %v1717 = vperm.slane %v1713, %v1716
        %v1718 = vrot.slane %v1701, 4
        %v1719 = vsel %vm1067, %v1718, %v1699
        %v1721 = vunpack.c.l.s4 1983009808
        %v1722 = vunpack.c.0.s8 %v1721
        %v1723 = vperm.slane %v1719, %v1722
        %v1724 = vrot.slane %v1712, 4
        %v1725 = vsel %vm1067, %v1724, %v1706
        %v1726 = vrot.slane %v1706, 4
        %v1727 = vsel %vm1067, %v1712, %v1726
        %v1729 = vunpack.c.l.s4 1934713408
        %v1730 = vunpack.c.0.s8 %v1729
        %v1731 = vperm.slane %v1725, %v1730
        %v1733 = vunpack.c.l.s4 1934713408
        %v1734 = vunpack.c.0.s8 %v1733
        %v1735 = vperm.slane %v1727, %v1734
        %v1736 = vrot.slane %v1723, 4
        %v1737 = vsel %vm1067, %v1736, %v1717
        %v1738 = vrot.slane %v1717, 4
        %v1739 = vsel %vm1067, %v1723, %v1738
        %v1741 = vunpack.c.l.s4 1934713408
        %v1742 = vunpack.c.0.s8 %v1741
        %v1743 = vperm.slane %v1737, %v1742
        %v1745 = vunpack.c.l.s4 1934713408
        %v1746 = vunpack.c.0.s8 %v1745
        %v1747 = vperm.slane %v1739, %v1746
        %v1748 = vrot.slane %v1743, 4
        %v1749 = vsel %vm1067, %v1748, %v1731
        %v1750 = vrot.slane %v1731, 4
        %v1751 = vsel %vm1067, %v1743, %v1750
        %v1752 = vrot.slane %v1747, 4
        %v1753 = vsel %vm1067, %v1752, %v1735
        %v1754 = vrot.slane %v1735, 4
        %v1755 = vsel %vm1067, %v1747, %v1754
        %1757 = vrot.lane.b32.xlu0 %v1751, 8
        %v1758 = vpop.permute.xlu0 %1757
        %1761 = vrot.lane.b32.xlu0 %v1753, 16
        %v1762 = vpop.permute.xlu0 %1761
        %1765 = vrot.lane.b32.xlu0 %v1755, 24
        %v1766 = vpop.permute.xlu0 %1765
        %v1768 = vsel %vm1440, %v1749, %v1758
        %vm1769 = vcmask 130048
        %v1770 = vsel %vm1769, %v1768, %v1762
        %vm1771 = vcmask 195584
        %v1772 = vsel %vm1771, %v1770, %v1766
        %v1773 = vmul.f32 %v1052, 5.0
        %v1774 = vxor.u32 %v1773, 2147483648
        %v1775 = vmul.f32 %v1774, 1.442695
        %v1776 = vpow.pop %v1775
        %v1777 = vadd.f32 %v1776, 1.0
        %v1778 = vrcp.pop %v1777
        %v1779 = vmul.f32 %v1777, %v1778
        %v1780 = vsub.f32 1.0, %v1779
        %v1781 = vmul.f32 %v1778, %v1780
        %v1782 = vadd.f32 %v1778, %v1781
        %vm1783 = vweird.f32 %v1777
        %vm1784 = vweird.f32 %v1778
        %vm1785 = vmor %vm1783, %vm1784
        %v1786 = vsel %vm1785, %v1778, %v1782
        %v1787 = vand.u32 2147483647, %v1777
        %vm1788 = vcmp.eq.f32.partialorder %v1787, 8.507059e+37
        %v1789 = vand.u32 %v1777, 2147483648
        %v1790 = vor.u32 1.1754944e-38, %v1789
        %v1791 = vsel %vm1788, %v1790, %v1786
        %v1792 = vmul.f32 1.0, %v1791
        %v1793 = vadd.f32 %v1792, 1e-05
        %v1794 = vmul.f32 %v1793, 1.0986123
        %v1795 = vmul.f32 %v1794, 1.442695
        %v1796 = vpow.pop %v1795
        %v1797 = vsub.f32 %v1796, 1.0
        %1799 = vrot.lane.b32.xlu0 %v1797, 32
        %v1800 = vpop.permute.xlu0 %1799
        %1802 = vxpose.xlu0.b32.start [1/16] %v1800, 128
        %1803 = vxpose.xlu0.b32.cont [2/16] 0.0, 128
        %1804 = vxpose.xlu0.b32.cont [3/16] 0.0, 128
        %1805 = vxpose.xlu0.b32.cont [4/16] 0.0, 128
        %1806 = vxpose.xlu0.b32.cont [5/16] 0.0, 128
        %1807 = vxpose.xlu0.b32.cont [6/16] 0.0, 128
        %1808 = vxpose.xlu0.b32.cont [7/16] 0.0, 128
        %1809 = vxpose.xlu0.b32.cont [8/16] 0.0, 128
        %1810 = vxpose.xlu0.b32.cont [9/16] 0.0, 128
        %1811 = vxpose.xlu0.b32.cont [10/16] 0.0, 128
        %1812 = vxpose.xlu0.b32.cont [11/16] 0.0, 128
        %1813 = vxpose.xlu0.b32.cont [12/16] 0.0, 128
        %1814 = vxpose.xlu0.b32.cont [13/16] 0.0, 128
        %1815 = vxpose.xlu0.b32.cont [14/16] 0.0, 128
        %1816 = vxpose.xlu0.b32.cont [15/16] 0.0, 128
        %1817 = vxpose.xlu0.b32.end [16/16] 0.0, 128
        %v1818 = vpop.trf.xlu0
        %v1819 = vpop.trf.xlu0
        %v1820 = vpop.trf.xlu0
        %v1821 = vpop.trf.xlu0
        %v1822 = vpop.trf.xlu0
        %v1823 = vpop.trf.xlu0
        %v1824 = vpop.trf.xlu0
        %v1825 = vpop.trf.xlu0
        %v1826 = vpop.trf.xlu0
        %v1827 = vpop.trf.xlu0
        %v1828 = vpop.trf.xlu0
        %v1829 = vpop.trf.xlu0
        %v1830 = vpop.trf.xlu0
        %v1831 = vpop.trf.xlu0
        %v1832 = vpop.trf.xlu0
        %v1833 = vpop.trf.xlu0
        %vm1834 = vcmask 60416
        %1835 = vst.msk [vmem:[%s978] sm:$0xf] %vm1834, %v1818
        %v1836 = vmul.f32 %v1818, 2.5066283
        %v1837 = vlog2.pop %v1836
        %v1838 = vmul.f32 %v1837, 0.6931472
        %v1839 = vsub.f32 0.0, %v1838
        %v1840 = vmul.f32 %v1818, 2.0
        %v1841 = vmul.f32 %v1840, %v1818
        %v1842 = vrcp.pop %v1841
        %v1843 = vmul.f32 %v1841, %v1842
        %v1844 = vsub.f32 1.0, %v1843
        %v1845 = vmul.f32 %v1842, %v1844
        %v1846 = vadd.f32 %v1842, %v1845
        %vm1847 = vweird.f32 %v1841
        %vm1848 = vweird.f32 %v1842
        %vm1849 = vmor %vm1847, %vm1848
        %v1850 = vsel %vm1849, %v1842, %v1846
        %v1851 = vand.u32 2147483647, %v1841
        %vm1852 = vcmp.eq.f32.partialorder %v1851, 8.507059e+37
        %v1853 = vand.u32 %v1841, 2147483648
        %v1854 = vor.u32 1.1754944e-38, %v1853
        %v1855 = vsel %vm1852, %v1854, %v1850
        %v1856 = vperm.slane %v1839, 0
        %v1857 = vlaneseq
        %v1858 = vshrl.u32 %v1857, 7
        %1860 = vset.pattern.permute.xlu0 %v1858
        %1861 = vperm.xlu0 %1860, %v1856
        %v1862 = vpop.permute.xlu0 %1861
        %v1863 = vperm.slane %v1839, 1
        %v1864 = vlaneseq
        %v1865 = vshrl.u32 %v1864, 7
        %1867 = vset.pattern.permute.xlu0 %v1865
        %1868 = vperm.xlu0 %1867, %v1863
        %v1869 = vpop.permute.xlu0 %1868
        %v1870 = vperm.slane %v1839, 2
        %v1871 = vlaneseq
        %v1872 = vshrl.u32 %v1871, 7
        %1874 = vset.pattern.permute.xlu0 %v1872
        %1875 = vperm.xlu0 %1874, %v1870
        %v1876 = vpop.permute.xlu0 %1875
        %v1877 = vperm.slane %v1839, 3
        %v1878 = vlaneseq
        %v1879 = vshrl.u32 %v1878, 7
        %1881 = vset.pattern.permute.xlu0 %v1879
        %1882 = vperm.xlu0 %1881, %v1877
        %v1883 = vpop.permute.xlu0 %1882
        %v1884 = vld [vmem:[%s15] sm:$0xff]
        %v1885 = vperm.slane %v1855, 0
        %v1886 = vlaneseq
        %v1887 = vshrl.u32 %v1886, 7
        %1889 = vset.pattern.permute.xlu0 %v1887
        %1890 = vperm.xlu0 %1889, %v1885
        %v1891 = vpop.permute.xlu0 %1890
        %v1892 = vperm.slane %v1855, 1
        %v1893 = vlaneseq
        %v1894 = vshrl.u32 %v1893, 7
        %1896 = vset.pattern.permute.xlu0 %v1894
        %1897 = vperm.xlu0 %1896, %v1892
        %v1898 = vpop.permute.xlu0 %1897
        %v1899 = vperm.slane %v1855, 2
        %v1900 = vlaneseq
        %v1901 = vshrl.u32 %v1900, 7
        %1903 = vset.pattern.permute.xlu0 %v1901
        %1904 = vperm.xlu0 %1903, %v1899
        %v1905 = vpop.permute.xlu0 %1904
        %v1906 = vperm.slane %v1855, 3
        %v1907 = vlaneseq
        %v1908 = vshrl.u32 %v1907, 7
        %1910 = vset.pattern.permute.xlu0 %v1908
        %1911 = vperm.xlu0 %1910, %v1906
        %v1912 = vpop.permute.xlu0 %1911
        %v1913 = vmul.f32 %v1884, %v1891
        %v1914 = vmul.f32 %v1884, %v1898
        %v1915 = vmul.f32 %v1884, %v1905
        %v1916 = vmul.f32 %v1884, %v1912
        %v1917 = vsub.f32 %v1862, %v1913
        %v1918 = vsub.f32 %v1869, %v1914
        %v1919 = vsub.f32 %v1876, %v1915
        %v1920 = vsub.f32 %v1883, %v1916
        %v1921 = vmul.f32 %v1917, 1.442695
        %v1922 = vpow.pop %v1921
        %v1923 = vmul.f32 %v1918, 1.442695
        %v1924 = vpow.pop %v1923
        %v1925 = vmul.f32 %v1919, 1.442695
        %v1926 = vpow.pop %v1925
        %v1927 = vmul.f32 %v1920, 1.442695
        %v1928 = vpow.pop %v1927
        %1929 = vst.msk [vmem:[%s971] sm:$0xff] %vm1440, %v1922
        %1930 = vst.msk [vmem:[%s971 + $0x8] sm:$0xff] %vm1440, %v1924
        %1931 = vst.msk [vmem:[%s971 + $0x10] sm:$0xff] %vm1440, %v1926
        %1932 = vst.msk [vmem:[%s971 + $0x18] sm:$0xff] %vm1440, %v1928
        %v1933 = vpack.c.bf16 %v1772, %v1772
        %v1934 = vld [vmem:[%s988] sm:$0xf]
        %v1935 = vld [vmem:[%s988 + $0x4] sm:$0xf]
        %v1936 = vld [vmem:[%s988 + $0x8] sm:$0xf]
        %v1937 = vld [vmem:[%s988 + $0xc] sm:$0xf]
        %v1938 = vld [vmem:[%s812] sm:$0x1]
        %v1940 = vperm.slane %v1938, 0
        %v1946 = vunpack.c.l.b16 %v1934
        %v1947 = vunpack.c.l.b16 %v1935
        %v1948 = vunpack.c.l.b16 %v1936
        %v1949 = vunpack.c.l.b16 %v1937
        %v1950 = vpack.c.b16 %v1947, %v1946
        %v1951 = vpack.c.b16 %v1949, %v1948
        %v1955 = vsel %vm1038, %v1933, 0
        %1957 = vmatpush.bf16.msra.mxu0 0
        %1958 = vmatpush.bf16.msra.mxu0 0
        %1959 = vmatpush.bf16.msra.mxu0 0
        %1960 = vmatpush.bf16.msra.mxu0 0
        %1961 = vmatpush.bf16.msra.mxu0 0
        %1962 = vmatpush.bf16.msra.mxu0 0
        %1963 = vmatpush.bf16.msra.mxu0 %v1951
        %1964 = vmatpush.bf16.msra.mxu0 %v1950
        %1965 = vmatmul.bf16.gmra.mxu0 %v1955
        %v1966 = vpop.f32.mrf.mxu0
        %v1967 = vadd.f32 %v1940, %v1966
        %v1968 = vpop.f32.mrf.mxu0
        %1969 = vdwg.mxu0
        %v1970 = vadd.f32 %v1016, %v1967
        %v1971 = vsel %vm1038, %v1970, 0.0
        %1972 = vadd.xlane.f32.xlu0 %v1971
        %v1973 = vpop.xlane.xlu0 %1972
        %v1974 = vrcp.pop 32.0
        %v1975 = vmul.f32 32.0, %v1974
        %v1976 = vsub.f32 1.0, %v1975
        %v1977 = vmul.f32 %v1974, %v1976
        %v1978 = vadd.f32 %v1974, %v1977
        %vm1979 = vweird.f32 %v1974
        %v1980 = vsel %vm1979, %v1974, %v1978
        %v1981 = vmul.f32 %v1973, %v1980
        %v1982 = vsub.f32 %v1970, %v1981
        %v1983 = vmul.f32 %v1982, %v1982
        %v1984 = vsel %vm1038, %v1983, 0.0
        %1985 = vadd.xlane.f32.xlu0 %v1984
        %v1986 = vpop.xlane.xlu0 %1985
        %v1987 = vmul.f32 %v1986, %v1980
        %v1988 = vadd.f32 %v1987, 1e-05
        %v1989 = vrsqrt.pop %v1988
        %v1990 = vmul.f32 %v1989, %v1988
        %v1991 = vmul.f32 %v1990, %v1989
        %v1992 = vmul.f32 0.5, %v1991
        %v1993 = vsub.f32 1.5, %v1992
        %v1994 = vmul.f32 %v1989, %v1993
        %vm1995 = vweird.f32 %v1988
        %vm1996 = vweird.f32 %v1989
        %vm1997 = vmor %vm1995, %vm1996
        %v1998 = vsel %vm1997, %v1989, %v1994
        %v1999 = vmul.f32 %v1982, %v1998
        %v2000 = vld [vmem:[%s839] sm:$0x1]
        %v2002 = vperm.slane %v2000, 0
        %v2004 = vmul.f32 %v1999, %v2002
        %v2005 = vld [vmem:[%s848] sm:$0x1]
        %v2007 = vperm.slane %v2005, 0
        %v2009 = vadd.f32 %v2004, %v2007
        %v2010 = vpack.c.bf16 %v2009, %v2009
        %v2011 = vld [vmem:[%s993] sm:$0xf]
        %v2012 = vld [vmem:[%s993 + $0x4] sm:$0xf]
        %v2013 = vld [vmem:[%s993 + $0x8] sm:$0xf]
        %v2014 = vld [vmem:[%s993 + $0xc] sm:$0xf]
        %v2015 = vld [vmem:[%s821] sm:$0x1]
        %v2017 = vperm.slane %v2015, 0
        %v2023 = vunpack.c.l.b16 %v2011
        %v2024 = vunpack.c.l.b16 %v2012
        %v2025 = vunpack.c.l.b16 %v2013
        %v2026 = vunpack.c.l.b16 %v2014
        %v2027 = vpack.c.b16 %v2024, %v2023
        %v2028 = vpack.c.b16 %v2026, %v2025
        %v2032 = vsel %vm1038, %v2010, 0
        %2034 = vmatpush.bf16.msra.mxu0 0
        %2035 = vmatpush.bf16.msra.mxu0 0
        %2036 = vmatpush.bf16.msra.mxu0 0
        %2037 = vmatpush.bf16.msra.mxu0 0
        %2038 = vmatpush.bf16.msra.mxu0 0
        %2039 = vmatpush.bf16.msra.mxu0 0
        %2040 = vmatpush.bf16.msra.mxu0 %v2028
        %2041 = vmatpush.bf16.msra.mxu0 %v2027
        %2042 = vmatmul.bf16.gmra.mxu0 %v2032
        %v2043 = vpop.f32.mrf.mxu0
        %v2044 = vadd.f32 %v2017, %v2043
        %v2045 = vpop.f32.mrf.mxu0
        %2046 = vdwg.mxu0
        %v2047 = vmax.f32 %v2044, 0.0
        %v2048 = vpack.c.bf16 %v2047, %v2047
        %v2049 = vld [vmem:[%s998] sm:$0xf]
        %v2050 = vld [vmem:[%s998 + $0x4] sm:$0xf]
        %v2051 = vld [vmem:[%s998 + $0x8] sm:$0xf]
        %v2052 = vld [vmem:[%s998 + $0xc] sm:$0xf]
        %v2053 = vld [vmem:[%s998 + $0x10] sm:$0xf]
        %v2054 = vld [vmem:[%s998 + $0x14] sm:$0xf]
        %v2055 = vld [vmem:[%s998 + $0x18] sm:$0xf]
        %v2056 = vld [vmem:[%s998 + $0x1c] sm:$0xf]
        %v2057 = vld [vmem:[%s830] sm:$0x1]
        %v2059 = vperm.slane %v2057, 0
        %v2069 = vunpack.c.l.b16 %v2049
        %v2070 = vunpack.c.l.b16 %v2050
        %v2071 = vunpack.c.l.b16 %v2051
        %v2072 = vunpack.c.l.b16 %v2052
        %v2073 = vunpack.c.l.b16 %v2053
        %v2074 = vunpack.c.l.b16 %v2054
        %v2075 = vunpack.c.l.b16 %v2055
        %v2076 = vunpack.c.l.b16 %v2056
        %v2077 = vpack.c.b16 %v2070, %v2069
        %v2078 = vpack.c.b16 %v2072, %v2071
        %v2079 = vpack.c.b16 %v2074, %v2073
        %v2080 = vpack.c.b16 %v2076, %v2075
        %vm2085 = vcmask 523264
        %v2087 = vsel %vm2085, %v2048, 0
        %2089 = vmatpush.bf16.msra.mxu0 0
        %2090 = vmatpush.bf16.msra.mxu0 0
        %2091 = vmatpush.bf16.msra.mxu0 0
        %2092 = vmatpush.bf16.msra.mxu0 0
        %2093 = vmatpush.bf16.msra.mxu0 %v2080
        %2094 = vmatpush.bf16.msra.mxu0 %v2079
        %2095 = vmatpush.bf16.msra.mxu0 %v2078
        %2096 = vmatpush.bf16.msra.mxu0 %v2077
        %2097 = vmatmul.bf16.gmra.mxu0 %v2087
        %v2098 = vpop.f32.mrf.mxu0
        %v2099 = vadd.f32 %v2059, %v2098
        %v2100 = vpop.f32.mrf.mxu0
        %2101 = vdwg.mxu0
        %v2102 = vadd.f32 %v2009, %v2099
        %v2103 = vsel %vm1038, %v2102, 0.0
        %2104 = vadd.xlane.f32.xlu0 %v2103
        %v2105 = vpop.xlane.xlu0 %2104
        %v2106 = vmul.f32 %v2105, %v1980
        %v2107 = vsub.f32 %v2102, %v2106
        %v2108 = vmul.f32 %v2107, %v2107
        %v2109 = vsel %vm1038, %v2108, 0.0
        %2110 = vadd.xlane.f32.xlu0 %v2109
        %v2111 = vpop.xlane.xlu0 %2110
        %v2112 = vmul.f32 %v2111, %v1980
        %v2113 = vadd.f32 %v2112, 1e-05
        %v2114 = vrsqrt.pop %v2113
        %v2115 = vmul.f32 %v2114, %v2113
        %v2116 = vmul.f32 %v2115, %v2114
        %v2117 = vmul.f32 0.5, %v2116
        %v2118 = vsub.f32 1.5, %v2117
        %v2119 = vmul.f32 %v2114, %v2118
        %vm2120 = vweird.f32 %v2113
        %vm2121 = vweird.f32 %v2114
        %vm2122 = vmor %vm2120, %vm2121
        %v2123 = vsel %vm2122, %v2114, %v2119
        %v2124 = vmul.f32 %v2107, %v2123
        %v2125 = vld [vmem:[%s857] sm:$0x1]
        %v2127 = vperm.slane %v2125, 0
        %v2129 = vmul.f32 %v2124, %v2127
        %v2130 = vld [vmem:[%s1001] sm:$0x1]
        %v2132 = vperm.slane %v2130, 0
        %v2134 = vadd.f32 %v2129, %v2132
        %2135 = vst.msk [vmem:[#allocation2] sm:$0xff] %vm1038, %v2134
        %p2136 = scmp.eq.s32.totalorder %s60, 1
        // Predicated region
        $region121: #{tpu_custom_call.1} parent=83 // pred_check
          %p2137 = pneg %p2136
        $region122: #{tpu_custom_call.1} parent=83 // pred_check_branch
          %2139 = sbr.rel (%p2137) target = $region124
        $region123: #{tpu_custom_call.1} parent=83 // pred_region
          %v2140 = vsel %vm1038, %v2134, 0.0
          %2141 = vadd.xlane.f32.xlu0 %v2140
          %v2142 = vpop.xlane.xlu0 %2141
          %v2143 = vmul.f32 %v2142, %v1980
          %v2144 = vsub.f32 %v2134, %v2143
          %v2145 = vmul.f32 %v2144, %v2144
          %v2146 = vsel %vm1038, %v2145, 0.0
          %2147 = vadd.xlane.f32.xlu0 %v2146
          %v2148 = vpop.xlane.xlu0 %2147
          %v2149 = vmul.f32 %v2148, %v1980
          %v2150 = vadd.f32 %v2149, 1e-05
          %v2151 = vrsqrt.pop %v2150
          %v2152 = vmul.f32 %v2151, %v2150
          %v2153 = vmul.f32 %v2152, %v2151
          %v2154 = vmul.f32 0.5, %v2153
          %v2155 = vsub.f32 1.5, %v2154
          %v2156 = vmul.f32 %v2151, %v2155
          %vm2157 = vweird.f32 %v2150
          %vm2158 = vweird.f32 %v2151
          %vm2159 = vmor %vm2157, %vm2158
          %v2160 = vsel %vm2159, %v2151, %v2156
          %v2161 = vmul.f32 %v2144, %v2160
          %v2162 = vld [vmem:[%s13] sm:$0x1]
          %v2164 = vperm.slane %v2162, 0
          %v2166 = vmul.f32 %v2161, %v2164
          %v2167 = vld [vmem:[%s14] sm:$0x1]
          %v2169 = vperm.slane %v2167, 0
          %v2171 = vadd.f32 %v2166, %v2169
          %2172 = vst.msk [vmem:[%s957] sm:$0xff] %vm1038, %v2171
        $region124: #{tpu_custom_call.1} parent=83 // pred_fallthru
          _
        %s2173 = sand.u32 %s476, 1
        %s2174 = scalar_lea.sflag [#allocation5], %s2173
        %s2175 = sand.u32 %s476, 1
        %s2176 = smul.addr %s2175, 8
        %s2177 = scalar_lea.vmem [#allocation17], %s2176
        %s2178 = sand.u32 %s55, 1
        %s2179 = scalar_lea.sflag [#allocation19], %s2178
        %s2180 = sand.u32 %s506, 1
        %s2181 = smul.addr %s2180, 32
        %s2182 = scalar_lea.vmem [#allocation18], %s2181
        %s2183 = sand.u32 %s55, 1
        %s2184 = scalar_lea.sflag [#allocation19], %s2183
        %s2185 = sand.u32 %s536, 1
        %s2186 = smul.addr %s2185, 32
        %s2187 = scalar_lea.vmem [#allocation20], %s2186
        %s2188 = sand.u32 %s566, 1
        %s2189 = scalar_lea.sflag [#allocation22], %s2188
        %s2190 = sand.u32 %s566, 1
        %s2191 = smul.addr %s2190, 4
        %s2192 = scalar_lea.vmem [#allocation21], %s2191
        // Predicated region
        $region125: #{tpu_custom_call.1} parent=83 // pred_check
          %p2193 = pneg %p486
        $region126: #{tpu_custom_call.1} parent=83 // pred_check_branch
          %2195 = sbr.rel (%p2193) target = $region128
        $region127: #{tpu_custom_call.1} parent=83 // pred_region
          %2197 = vsyncadd %s2174, 0
          %s2198 = smul.addr %s59, 8
          %s2199 = scalar_lea.hbm %s16, %s2198
          %s2201 = sshll.u32 %s2177, 4
          %s2202 = int_to_ptr.vmem [resolvable:$true] %s2201
          %s2203 = sshll.u32 %s2199, 4
          %s2204 = int_to_ptr.hbm [resolvable:$true] %s2203
          %2206 = dma.vmem_to_hbm [thread:$0]  %s2202, 128, %s2204, %s2174
        $region128: #{tpu_custom_call.1} parent=83 // pred_fallthru
          _
        // Predicated region
        $region129: #{tpu_custom_call.1} parent=83 // pred_check
          %p2207 = pneg %p516
        $region130: #{tpu_custom_call.1} parent=83 // pred_check_branch
          %2209 = sbr.rel (%p2207) target = $region132
        $region131: #{tpu_custom_call.1} parent=83 // pred_region
          %s2210 = smul.u32 %s60, 2
          %s2211 = sadd.s32 %s2210, %s59
          %2213 = vsyncadd %s2179, 0
          %s2214 = smul.addr %s2211, 4
          %s2215 = smul.addr %s2214, 8
          %s2216 = scalar_lea.hbm %s17, %s2215
          %s2217 = sshll.u32 %s2182, 4
          %s2218 = int_to_ptr.vmem [resolvable:$true] %s2217
          %s2219 = sshll.u32 %s2216, 4
          %s2220 = int_to_ptr.hbm [resolvable:$true] %s2219
          %2225 = dma.vmem_to_hbm [thread:$0]  %s2218, 512, %s2220, %s2179, 128, 128, 8
        $region132: #{tpu_custom_call.1} parent=83 // pred_fallthru
          _
        // Predicated region
        $region133: #{tpu_custom_call.1} parent=83 // pred_check
          %p2226 = pneg %p546
        $region134: #{tpu_custom_call.1} parent=83 // pred_check_branch
          %2228 = sbr.rel (%p2226) target = $region136
        $region135: #{tpu_custom_call.1} parent=83 // pred_region
          %s2229 = smul.u32 %s60, 2
          %s2230 = sadd.s32 %s2229, %s59
          %2232 = vsyncadd %s2184, 0
          %s2233 = smul.addr %s2230, 4
          %s2234 = smul.addr %s2233, 8
          %s2235 = scalar_lea.hbm %s18, %s2234
          %s2236 = sshll.u32 %s2187, 4
          %s2237 = int_to_ptr.vmem [resolvable:$true] %s2236
          %s2238 = sshll.u32 %s2235, 4
          %s2239 = int_to_ptr.hbm [resolvable:$true] %s2238
          %2244 = dma.vmem_to_hbm [thread:$0]  %s2237, 512, %s2239, %s2184, 128, 128, 8
        $region136: #{tpu_custom_call.1} parent=83 // pred_fallthru
          _
        // Predicated region
        $region137: #{tpu_custom_call.1} parent=83 // pred_check
          %p2245 = pneg %p576
        $region138: #{tpu_custom_call.1} parent=83 // pred_check_branch
          %2247 = sbr.rel (%p2245) target = $region140
        $region139: #{tpu_custom_call.1} parent=83 // pred_region
          %s2248 = smul.u32 %s60, 2
          %s2249 = sadd.s32 %s2248, %s59
          %2251 = vsyncadd %s2189, 0
          %s2252 = smul.addr %s2249, 4
          %s2253 = scalar_lea.hbm %s19, %s2252
          %s2255 = sshll.u32 %s2192, 4
          %s2256 = int_to_ptr.vmem [resolvable:$true] %s2255
          %s2257 = sshll.u32 %s2253, 4
          %s2258 = int_to_ptr.hbm [resolvable:$true] %s2257
          %2260 = dma.vmem_to_hbm [thread:$0]  %s2256, 64, %s2258, %s2189
        $region140: #{tpu_custom_call.1} parent=83 // pred_fallthru
          _
      $region84: #{tpu_custom_call.1} parent=5 // pred_fallthru
        _
      %p2261 = scmp.le.s32.totalorder 2, %s50
      // Predicated region
      $region141: #{tpu_custom_call.1} parent=5 // pred_check
        %p2262 = pneg %p2261
      $region142: #{tpu_custom_call.1} parent=5 // pred_check_branch
        %2264 = sbr.rel (%p2262) target = $region144
      $region143: #{tpu_custom_call.1} parent=5 // pred_region
        %s2265 = ssub.s32 %s50, 2
        // Predicated region
        $region145: #{tpu_custom_call.1} parent=143 // pred_check
          %p2266 = pneg %p492
        $region146: #{tpu_custom_call.1} parent=143 // pred_check_branch
          %2268 = sbr.rel (%p2266) target = $region148
        $region147: #{tpu_custom_call.1} parent=143 // pred_region
          %s2269 = sand.u32 %s477, 1
          %s2270 = scalar_lea.sflag [#allocation5], %s2269
          %s2271 = sand.u32 %s477, 1
          %s2272 = smul.addr %s2271, 8
          %s2273 = scalar_lea.vmem [#allocation17], %s2272
          %2275 = dma.done %s2270, 128
        $region148: #{tpu_custom_call.1} parent=143 // pred_fallthru
          _
        // Predicated region
        $region149: #{tpu_custom_call.1} parent=143 // pred_check
          %p2276 = pneg %p522
        $region150: #{tpu_custom_call.1} parent=143 // pred_check_branch
          %2278 = sbr.rel (%p2276) target = $region152
        $region151: #{tpu_custom_call.1} parent=143 // pred_region
          %s2279 = sand.u32 %s56, 1
          %s2280 = scalar_lea.sflag [#allocation19], %s2279
          %s2281 = sand.u32 %s507, 1
          %s2282 = smul.addr %s2281, 32
          %s2283 = scalar_lea.vmem [#allocation18], %s2282
          %2285 = dma.done %s2280, 512
        $region152: #{tpu_custom_call.1} parent=143 // pred_fallthru
          _
        // Predicated region
        $region153: #{tpu_custom_call.1} parent=143 // pred_check
          %p2286 = pneg %p552
        $region154: #{tpu_custom_call.1} parent=143 // pred_check_branch
          %2288 = sbr.rel (%p2286) target = $region156
        $region155: #{tpu_custom_call.1} parent=143 // pred_region
          %s2289 = sand.u32 %s56, 1
          %s2290 = scalar_lea.sflag [#allocation19], %s2289
          %s2291 = sand.u32 %s537, 1
          %s2292 = smul.addr %s2291, 32
          %s2293 = scalar_lea.vmem [#allocation20], %s2292
          %2295 = dma.done %s2290, 512
        $region156: #{tpu_custom_call.1} parent=143 // pred_fallthru
          _
        // Predicated region
        $region157: #{tpu_custom_call.1} parent=143 // pred_check
          %p2296 = pneg %p582
        $region158: #{tpu_custom_call.1} parent=143 // pred_check_branch
          %2298 = sbr.rel (%p2296) target = $region160
        $region159: #{tpu_custom_call.1} parent=143 // pred_region
          %s2299 = sand.u32 %s567, 1
          %s2300 = scalar_lea.sflag [#allocation22], %s2299
          %s2301 = sand.u32 %s567, 1
          %s2302 = smul.addr %s2301, 4
          %s2303 = scalar_lea.vmem [#allocation21], %s2302
          %2305 = dma.done %s2300, 64
        $region160: #{tpu_custom_call.1} parent=143 // pred_fallthru
          _
      $region144: #{tpu_custom_call.1} parent=5 // pred_fallthru
        _
    $region6: #{tpu_custom_call.1} parent=1 // loop_footer
      %s54 = sadd.s32 1, %s50
    $region7: #{tpu_custom_call.1} parent=1 // loop_footer_branch
      %49 = sbr.rel target = $region3
    $region8: #{tpu_custom_call.1} parent=1 // loop_exit
      _
    %2306 = vsyncpa [#allocation4], 1
    %s2307 = scalar_lea.sflag [#allocation4], 1
    %2308 = vsyncpa %s2307, 1
    %2309 = vsyncpa [#allocation7], 1
    %s2310 = scalar_lea.sflag [#allocation7], 1
    %2311 = vsyncpa %s2310, 1
    %2312 = vsyncpa [#allocation10], 1
    %s2313 = scalar_lea.sflag [#allocation10], 1
    %2314 = vsyncpa %s2313, 1
    %2315 = vsyncpa [#allocation13], 1
    %s2316 = scalar_lea.sflag [#allocation13], 1
    %2317 = vsyncpa %s2316, 1
    %2318 = vsyncpa [#allocation16], 1
    %s2319 = scalar_lea.sflag [#allocation16], 1
    %2320 = vsyncpa %s2319, 1
    %2321 = vsyncpa [#allocation5], 1
    %s2322 = scalar_lea.sflag [#allocation5], 1
    %2323 = vsyncpa %s2322, 1
    %2324 = vsyncpa [#allocation19], 1
    %s2325 = scalar_lea.sflag [#allocation19], 1
    %2326 = vsyncpa %s2325, 1
    %2327 = vsyncpa [#allocation22], 1
    %s2328 = scalar_lea.sflag [#allocation22], 1
    %2329 = vsyncpa %s2328, 1

</llo_original>
